<compile_context>
chip_gen: v5e
topology: v5e:2x2
jax: 0.10.0
libtpu: 0.0.40
codegen_flags: <defaults>
</compile_context>

<pallas_src>
import jax
import jax.numpy as jnp
from jax.experimental import pallas as pl
from jax.experimental.pallas import tpu as pltpu

LN_EPS = 1e-5  # nn.LayerNorm default


def _round_up(x, m):
    return ((x + m - 1) // m) * m


def prenorm_linear_kernel(x_ref, g_ref, b_ref, w_ref, wb_ref, o_ref):
    # x_ref: (TR, D) rows; g/b: (1, D) f32; w_ref: (D, TN) bf16;
    # wb_ref: (1, TN) f32; o_ref: (TR, TN).
    x = x_ref[...].astype(jnp.float32)

    # --- LayerNorm over last axis, f32 stats (biased variance, like PyTorch) ---
    mean = jnp.mean(x, axis=-1, keepdims=True)
    centered = x - mean
    var = jnp.mean(centered * centered, axis=-1, keepdims=True)
    xn = centered * jax.lax.rsqrt(var + LN_EPS)
    y = xn * g_ref[...].astype(jnp.float32) + b_ref[...].astype(jnp.float32)

    # --- Linear: bf16 operands on the MXU, f32 accumulation ---
    out = jnp.dot(y.astype(jnp.bfloat16), w_ref[...],
                  preferred_element_type=jnp.float32)
    out = out + wb_ref[...].astype(jnp.float32)
    o_ref[...] = out.astype(o_ref.dtype)


def prenorm_linear(x, gamma, beta, w, wb, *, row_tile=256, col_tile=256):
    """Fused LayerNorm(D) + Linear(D, D_out).

    x: (B, S, D); gamma/beta: (D,); w: (D, D_out); wb: (D_out,).
    """
    B, S, D = x.shape
    D_out = w.shape[1]
    rows = B * S

    # Tile sizes: lane-dense (multiples of 128 on the output/feature axes).
    tr = row_tile
    tn = min(col_tile, _round_up(D_out, 128))

    # cdiv-style padding instead of hard divisibility asserts.
    rows_p = _round_up(rows, tr)
    dout_p = _round_up(D_out, tn)

    x2 = x.reshape(rows, D)
    if rows_p != rows:
        x2 = jnp.pad(x2, ((0, rows_p - rows), (0, 0)))

    w_p, wb_p = w, wb
    if dout_p != D_out:
        w_p = jnp.pad(w, ((0, 0), (0, dout_p - D_out)))
        wb_p = jnp.pad(wb, ((0, dout_p - D_out),))

    g2 = gamma.reshape(1, D).astype(jnp.float32)
    b2 = beta.reshape(1, D).astype(jnp.float32)
    w_bf16 = w_p.astype(jnp.bfloat16)        # halve weight HBM/VMEM traffic
    wb2 = wb_p.reshape(1, dout_p).astype(jnp.float32)

    grid = (rows_p // tr, dout_p // tn)

    out2 = pl.pallas_call(
        prenorm_linear_kernel,
        out_shape=jax.ShapeDtypeStruct((rows_p, dout_p), x.dtype),
        grid_spec=pltpu.PrefetchScalarGridSpec(
            num_scalar_prefetch=0,
            grid=grid,
            in_specs=[
                pl.BlockSpec((tr, D), lambda i, j: (i, 0)),    # x row tile
                pl.BlockSpec((1, D), lambda i, j: (0, 0)),     # gamma (invariant)
                pl.BlockSpec((1, D), lambda i, j: (0, 0)),     # beta  (invariant)
                pl.BlockSpec((D, tn), lambda i, j: (0, j)),    # weight N-tile
                pl.BlockSpec((1, tn), lambda i, j: (0, j)),    # bias   N-tile
            ],
            out_specs=pl.BlockSpec((tr, tn), lambda i, j: (i, j)),
        ),
        compiler_params=pltpu.CompilerParams(
            dimension_semantics=("parallel", "parallel"),
            vmem_limit_bytes=48 * 1024 * 1024,
        ),
    )(x2, g2, b2, w_bf16, wb2)

    return out2[:rows, :D_out].reshape(B, S, D_out)


def reference(x, gamma, beta, w, wb):
    xf = x.astype(jnp.float32)
    mean = jnp.mean(xf, axis=-1, keepdims=True)
    var = jnp.mean((xf - mean) ** 2, axis=-1, keepdims=True)
    xn = (xf - mean) * jax.lax.rsqrt(var + LN_EPS)
    y = xn * gamma + beta
    return (y @ w + wb).astype(x.dtype)


if __name__ == "__main__":
    # Small-but-representative shapes: lane-dense feature dims, non-divisible
    # sequence length to exercise the padding path, rectangular Linear.
    B, S, D, D_out = 2, 70, 256, 512

    key = jax.random.PRNGKey(0)
    kx, kg, kb, kw, kwb = jax.random.split(key, 5)

    x = jax.random.normal(kx, (B, S, D), dtype=jnp.float32)

    # LayerNorm affine params (nontrivial to exercise the affine path).
    gamma = 1.0 + 0.1 * jax.random.normal(kg, (D,), dtype=jnp.float32)
    beta = 0.1 * jax.random.normal(kb, (D,), dtype=jnp.float32)

    # fn = Linear(D, D_out); weight stored (in, out) so kernel does y @ W.
    w = jax.random.normal(kw, (D, D_out), dtype=jnp.float32) / jnp.sqrt(D)
    wb = 0.1 * jax.random.normal(kwb, (D_out,), dtype=jnp.float32)

    out = prenorm_linear(x, gamma, beta, w, wb)
    out = jax.block_until_ready(out)

    ref = reference(x, gamma, beta, w, wb)
    assert out.shape == (B, S, D_out)
    # bf16 matmul operands => ~1e-2-level relative error vs the f32 reference.
    assert jnp.allclose(out, ref, atol=2e-2, rtol=2e-2), (
        float(jnp.max(jnp.abs(out - ref))))

    print("KERNEL_OK")
</pallas_src>

<mosaic_0001>
module attributes {stable_mosaic.version = 11 : i64} {
  func.func @prenorm_linear_kernel(%arg0: i32, %arg1: i32, %arg2: memref<256x256xf32, #tpu.memory_space<vmem>>, %arg3: memref<1x256xf32, #tpu.memory_space<vmem>>, %arg4: memref<1x256xf32, #tpu.memory_space<vmem>>, %arg5: memref<256x256xbf16, #tpu.memory_space<vmem>>, %arg6: memref<1x256xf32, #tpu.memory_space<vmem>>, %arg7: memref<256x256xf32, #tpu.memory_space<vmem>>) attributes {dimension_semantics = [#tpu.dimension_semantics<parallel>, #tpu.dimension_semantics<parallel>], iteration_bounds = array<i64: 1, 2>, scalar_prefetch = 0 : i64, scratch_operands = 0 : i64, tpu.core_type = #tpu.core_type<tc>, window_params = [{transform_indices = @transform_0, window_bounds = array<i64: 256, 256>}, {pipeline_mode = #tpu.pipeline_mode<synchronous>, transform_indices = @transform_1, window_bounds = array<i64: 1, 256>}, {pipeline_mode = #tpu.pipeline_mode<synchronous>, transform_indices = @transform_2, window_bounds = array<i64: 1, 256>}, {transform_indices = @transform_3, window_bounds = array<i64: 256, 256>}, {transform_indices = @transform_4, window_bounds = array<i64: 1, 256>}, {transform_indices = @transform_5, window_bounds = array<i64: 256, 256>}]} {
    %c0 = arith.constant 0 : index
    %c0_0 = arith.constant 0 : index
    %0 = vector.load %arg2[%c0, %c0_0] : memref<256x256xf32, #tpu.memory_space<vmem>>, vector<256x256xf32>
    %cst = arith.constant dense<0.000000e+00> : vector<256xf32>
    %1 = vector.multi_reduction <add>, %0, %cst [1] : vector<256x256xf32> to vector<256xf32>
    %2 = vector.shape_cast %1 : vector<256xf32> to vector<256x1xf32>
    %cst_1 = arith.constant 2.560000e+02 : f32
    %3 = vector.broadcast %cst_1 : f32 to vector<256x1xf32>
    %4 = arith.divf %2, %3 : vector<256x1xf32>
    %5 = vector.broadcast %4 : vector<256x1xf32> to vector<256x256xf32>
    %6 = arith.subf %0, %5 : vector<256x256xf32>
    %7 = arith.mulf %6, %6 : vector<256x256xf32>
    %cst_2 = arith.constant dense<0.000000e+00> : vector<256xf32>
    %8 = vector.multi_reduction <add>, %7, %cst_2 [1] : vector<256x256xf32> to vector<256xf32>
    %9 = vector.shape_cast %8 : vector<256xf32> to vector<256x1xf32>
    %cst_3 = arith.constant 2.560000e+02 : f32
    %10 = vector.broadcast %cst_3 : f32 to vector<256x1xf32>
    %11 = arith.divf %9, %10 : vector<256x1xf32>
    %cst_4 = arith.constant 9.99999974E-6 : f32
    %12 = vector.broadcast %cst_4 : f32 to vector<256x1xf32>
    %13 = arith.addf %11, %12 : vector<256x1xf32>
    %14 = math.rsqrt %13 : vector<256x1xf32>
    %15 = vector.broadcast %14 : vector<256x1xf32> to vector<256x256xf32>
    %16 = arith.mulf %6, %15 : vector<256x256xf32>
    %c0_5 = arith.constant 0 : index
    %c0_6 = arith.constant 0 : index
    %17 = vector.load %arg3[%c0_5, %c0_6] : memref<1x256xf32, #tpu.memory_space<vmem>>, vector<1x256xf32>
    %18 = vector.broadcast %17 : vector<1x256xf32> to vector<256x256xf32>
    %19 = arith.mulf %16, %18 : vector<256x256xf32>
    %c0_7 = arith.constant 0 : index
    %c0_8 = arith.constant 0 : index
    %20 = vector.load %arg4[%c0_7, %c0_8] : memref<1x256xf32, #tpu.memory_space<vmem>>, vector<1x256xf32>
    %21 = vector.broadcast %20 : vector<1x256xf32> to vector<256x256xf32>
    %22 = arith.addf %19, %21 : vector<256x256xf32>
    %23 = arith.truncf %22 : vector<256x256xf32> to vector<256x256xbf16>
    %c0_9 = arith.constant 0 : index
    %c0_10 = arith.constant 0 : index
    %24 = vector.load %arg5[%c0_9, %c0_10] : memref<256x256xbf16, #tpu.memory_space<vmem>>, vector<256x256xbf16>
    %cst_11 = arith.constant dense<0.000000e+00> : vector<256x256xf32>
    %25 = tpu.matmul %23, %24, %cst_11 {dimension_numbers = #tpu.dot_dimension_numbers<[1], [0], [0], [1], [0, 0, 1, 1], [], []>} : vector<256x256xbf16>, vector<256x256xbf16>, vector<256x256xf32> -> vector<256x256xf32>
    %c0_12 = arith.constant 0 : index
    %c0_13 = arith.constant 0 : index
    %26 = vector.load %arg6[%c0_12, %c0_13] : memref<1x256xf32, #tpu.memory_space<vmem>>, vector<1x256xf32>
    %27 = vector.broadcast %26 : vector<1x256xf32> to vector<256x256xf32>
    %28 = arith.addf %25, %27 : vector<256x256xf32>
    %c0_14 = arith.constant 0 : index
    %c0_15 = arith.constant 0 : index
    %29 = vector.load %arg7[%c0_14, %c0_15] : memref<256x256xf32, #tpu.memory_space<vmem>>, vector<256x256xf32>
    tpu.vector_store %arg7[%c0_14, %c0_15], %28 {strides = array<i32>} : memref<256x256xf32, #tpu.memory_space<vmem>>, vector<256x256xf32>,
    return
  }
  func.func @transform_0(%arg0: i32, %arg1: i32) -> (i32, i32) {
    %c0_i32 = arith.constant 0 : i32
    %c0_i32_0 = arith.constant 0 : i32
    return %arg0, %c0_i32 : i32, i32
  }
  func.func @transform_1(%arg0: i32, %arg1: i32) -> (i32, i32) {
    %c0_i32 = arith.constant 0 : i32
    %c0_i32_0 = arith.constant 0 : i32
    %c0_i32_1 = arith.constant 0 : i32
    return %c0_i32, %c0_i32_0 : i32, i32
  }
  func.func @transform_2(%arg0: i32, %arg1: i32) -> (i32, i32) {
    %c0_i32 = arith.constant 0 : i32
    %c0_i32_0 = arith.constant 0 : i32
    %c0_i32_1 = arith.constant 0 : i32
    return %c0_i32, %c0_i32_0 : i32, i32
  }
  func.func @transform_3(%arg0: i32, %arg1: i32) -> (i32, i32) {
    %c0_i32 = arith.constant 0 : i32
    %c0_i32_0 = arith.constant 0 : i32
    return %c0_i32, %arg1 : i32, i32
  }
  func.func @transform_4(%arg0: i32, %arg1: i32) -> (i32, i32) {
    %c0_i32 = arith.constant 0 : i32
    %c0_i32_0 = arith.constant 0 : i32
    return %c0_i32, %arg1 : i32, i32
  }
  func.func @transform_5(%arg0: i32, %arg1: i32) -> (i32, i32) {
    %c0_i32 = arith.constant 0 : i32
    return %arg0, %arg1 : i32, i32
  }
}

</mosaic_0001>

<llo_original>
// kernel: tpu_custom_call.1
$region0: #{tpu_custom_call.1}
  #allocation0 [shape = 'u32[]', space=smem, size = 0x4, offset = 0x4, fixed_abs, tag = 'smem constant byte address 0x4 - core index']
  #allocation1 [shape = 'u32[72,128]{1,0:T(1,128)}', space=vmem, size = 0x9000, scoped, tag = 'internal scratch']
  %s0 = inlined_call_operand.hbm [shape: f32[256,256], index: 0, kind: input, shape index: {}]
  %s1 = inlined_call_operand.hbm [shape: f32[1,256], index: 1, kind: input, shape index: {}]
  %s2 = inlined_call_operand.hbm [shape: f32[1,256], index: 2, kind: input, shape index: {}]
  %s3 = inlined_call_operand.hbm [shape: bf16[256,512], index: 3, kind: input, shape index: {}]
  %s4 = inlined_call_operand.hbm [shape: f32[1,512], index: 4, kind: input, shape index: {}]
  %s5 = inlined_call_operand.hbm [shape: f32[256,512], index: 5, kind: output, shape index: {}]
  %s6 = sld [smem:[#allocation0]]
  $region73: #{tpu_custom_call.1} parent=0
    _
  %s8 = ssub.s32 1, %s6
  %s9 = scalar_select 0, %s8, %s6
  $region1: #{tpu_custom_call.1} parent=0
    #allocation2 [shape = 'u8[262144]{0}', space=vmem, size = 0x40000, scoped, tag = 'input window, operand 0, single buffered']
    #allocation3 [shape = 's32[2]{0}', space=sflag, size = 0x8, scoped, tag = 'scoped memory for tpu_custom_call.1']
    #allocation4 [shape = 's32[2]{0}', space=sflag, size = 0x8, scoped, tag = 'scoped memory for tpu_custom_call.1']
    #allocation5 [shape = 'u8[1024]{0}', space=vmem, size = 0x400, scoped, tag = 'input window, operand 1, single buffered']
    #allocation6 [shape = 's32[1]{0}', space=sflag, size = 0x4, scoped, tag = 'scoped memory for tpu_custom_call.1']
    #allocation7 [shape = 'u8[1024]{0}', space=vmem, size = 0x400, scoped, tag = 'input window, operand 2, single buffered']
    #allocation8 [shape = 'u8[262144]{0}', space=vmem, size = 0x40000, scoped, tag = 'input window, operand 3']
    #allocation9 [shape = 's32[2]{0}', space=sflag, size = 0x8, scoped, tag = 'scoped memory for tpu_custom_call.1']
    #allocation10 [shape = 'u8[2048]{0}', space=vmem, size = 0x800, scoped, tag = 'input window, operand 4']
    #allocation11 [shape = 'u8[524288]{0}', space=vmem, size = 0x80000, scoped, tag = 'output window, operand 0']
    %10 = vsyncpa [#allocation3], 0
    %11 = vsyncpa [#allocation6], 0
    %12 = vsyncpa [#allocation9], 0
    %s13 = scalar_lea.sflag [#allocation9], 1
    %14 = vsyncpa %s13, 0
    %15 = vsyncpa [#allocation4], 0
    %s16 = scalar_lea.sflag [#allocation4], 1
    %17 = vsyncpa %s16, 0
    loop: start=0, step=1, limit=4
    $region2: #{tpu_custom_call.1} parent=1 // loop_pre_header
      _
    $region3: #{tpu_custom_call.1} parent=1 // loop_header
      %s19 = sphi 0, %s23
      %p20 = scmp.ge.s32.totalorder %s19, 4
      %s26 = sphi 0, %s38
      %s27 = sphi 0, %s34
      %s28 = sphi 0, %s26
      %s29 = sphi 0, %s27
      %s30 = sphi 0, %s28
      %s31 = sphi 0, %s29
      %s41 = sphi 0, %s43
      %s44 = sphi 0, %s41
      %s45 = sphi 0, %s44
      %s61 = sphi 0, %s45
      %s65 = sphi 0, %s65
      %s67 = sphi 0, %s65
      %s68 = sphi 0, %s67
      %s82 = sphi 0, %s68
      %s86 = sphi 0, %s86
      %s88 = sphi 0, %s86
      %s89 = sphi 0, %s88
      %s103 = sphi 0, %s89
      %s109 = sphi 0, %s111
      %s112 = sphi 0, %s109
      %s113 = sphi 0, %s112
      %s129 = sphi 0, %s113
      %s135 = sphi 0, %s137
      %s138 = sphi 0, %s135
      %s139 = sphi 0, %s138
      %s155 = sphi 0, %s139
      %s163 = sphi 0, %s165
      %s166 = sphi 0, %s163
      %s167 = sphi 0, %s166
      %s183 = sphi 0, %s167
    $region4: #{tpu_custom_call.1} parent=1 // loop_header_branch
      %22 = sbr.rel (%p20) target = $region8
    $region5: #{tpu_custom_call.1} parent=1 // loop_body
      %s24 = ssub.s32 %s19, 1
      %s25 = ssub.s32 %s19, 2
      %s32 = sadd.s32 1, %s27
      %p33 = scmp.ge.s32.totalorder %s32, 2
      %s34 = scalar_select %p33, 0, %s32
      %s35 = sadd.s32 1, %s26
      %s36 = scalar_select %p33, %s35, %s26
      %p37 = scmp.ge.s32.totalorder %s36, 1
      %s38 = scalar_select %p37, 0, %s36
      %s39 = ssub.s32 %s26, %s38
      %p40 = scmp.eq.s32.totalorder %s39, 0
      %s42 = sadd.s32 %s41, 1
      %s43 = scalar_select %p40, %s41, %s42
      %p46 = pneg %p40
      %p47 = scmp.eq.s32.totalorder %s19, 1
      %p48 = por %p46, %p47
      %p49 = scmp.ne.s32.totalorder %s41, %s44
      %p50 = scmp.eq.s32.totalorder %s19, 0
      %p51 = por %p49, %p50
      %p52 = scmp.ne.s32.totalorder %s41, %s44
      %p53 = scmp.eq.s32.totalorder %s24, 1
      %p54 = por %p52, %p53
      %p55 = scmp.ne.s32.totalorder %s44, %s45
      %p56 = scmp.eq.s32.totalorder %s24, 0
      %p57 = por %p55, %p56
      %p58 = scmp.ne.s32.totalorder %s44, %s45
      %p59 = scmp.eq.s32.totalorder %s25, 1
      %p60 = por %p58, %p59
      %p62 = scmp.ne.s32.totalorder %s45, %s61
      %p63 = scmp.eq.s32.totalorder %s25, 0
      %p64 = por %p62, %p63
      %s66 = sadd.s32 %s65, 1
      %p69 = scmp.eq.s32.totalorder %s19, 1
      %p70 = scmp.ne.s32.totalorder %s65, %s67
      %p71 = scmp.eq.s32.totalorder %s19, 0
      %p72 = por %p70, %p71
      %p73 = scmp.ne.s32.totalorder %s65, %s67
      %p74 = scmp.eq.s32.totalorder %s24, 1
      %p75 = por %p73, %p74
      %p76 = scmp.ne.s32.totalorder %s67, %s68
      %p77 = scmp.eq.s32.totalorder %s24, 0
      %p78 = por %p76, %p77
      %p79 = scmp.ne.s32.totalorder %s67, %s68
      %p80 = scmp.eq.s32.totalorder %s25, 1
      %p81 = por %p79, %p80
      %p83 = scmp.ne.s32.totalorder %s68, %s82
      %p84 = scmp.eq.s32.totalorder %s25, 0
      %p85 = por %p83, %p84
      %s87 = sadd.s32 %s86, 1
      %p90 = scmp.eq.s32.totalorder %s19, 1
      %p91 = scmp.ne.s32.totalorder %s86, %s88
      %p92 = scmp.eq.s32.totalorder %s19, 0
      %p93 = por %p91, %p92
      %p94 = scmp.ne.s32.totalorder %s86, %s88
      %p95 = scmp.eq.s32.totalorder %s24, 1
      %p96 = por %p94, %p95
      %p97 = scmp.ne.s32.totalorder %s88, %s89
      %p98 = scmp.eq.s32.totalorder %s24, 0
      %p99 = por %p97, %p98
      %p100 = scmp.ne.s32.totalorder %s88, %s89
      %p101 = scmp.eq.s32.totalorder %s25, 1
      %p102 = por %p100, %p101
      %p104 = scmp.ne.s32.totalorder %s89, %s103
      %p105 = scmp.eq.s32.totalorder %s25, 0
      %p106 = por %p104, %p105
      %s107 = ssub.s32 %s27, %s34
      %p108 = scmp.eq.s32.totalorder %s107, 0
      %s110 = sadd.s32 %s109, 1
      %s111 = scalar_select %p108, %s109, %s110
      %p114 = pneg %p108
      %p115 = scmp.eq.s32.totalorder %s19, 1
      %p116 = por %p114, %p115
      %p117 = scmp.ne.s32.totalorder %s109, %s112
      %p118 = scmp.eq.s32.totalorder %s19, 0
      %p119 = por %p117, %p118
      %p120 = scmp.ne.s32.totalorder %s109, %s112
      %p121 = scmp.eq.s32.totalorder %s24, 1
      %p122 = por %p120, %p121
      %p123 = scmp.ne.s32.totalorder %s112, %s113
      %p124 = scmp.eq.s32.totalorder %s24, 0
      %p125 = por %p123, %p124
      %p126 = scmp.ne.s32.totalorder %s112, %s113
      %p127 = scmp.eq.s32.totalorder %s25, 1
      %p128 = por %p126, %p127
      %p130 = scmp.ne.s32.totalorder %s113, %s129
      %p131 = scmp.eq.s32.totalorder %s25, 0
      %p132 = por %p130, %p131
      %s133 = ssub.s32 %s27, %s34
      %p134 = scmp.eq.s32.totalorder %s133, 0
      %s136 = sadd.s32 %s135, 1
      %s137 = scalar_select %p134, %s135, %s136
      %p140 = pneg %p134
      %p141 = scmp.eq.s32.totalorder %s19, 1
      %p142 = por %p140, %p141
      %p143 = scmp.ne.s32.totalorder %s135, %s138
      %p144 = scmp.eq.s32.totalorder %s19, 0
      %p145 = por %p143, %p144
      %p146 = scmp.ne.s32.totalorder %s135, %s138
      %p147 = scmp.eq.s32.totalorder %s24, 1
      %p148 = por %p146, %p147
      %p149 = scmp.ne.s32.totalorder %s138, %s139
      %p150 = scmp.eq.s32.totalorder %s24, 0
      %p151 = por %p149, %p150
      %p152 = scmp.ne.s32.totalorder %s138, %s139
      %p153 = scmp.eq.s32.totalorder %s25, 1
      %p154 = por %p152, %p153
      %p156 = scmp.ne.s32.totalorder %s139, %s155
      %p157 = scmp.eq.s32.totalorder %s25, 0
      %p158 = por %p156, %p157
      %s159 = ssub.s32 %s26, %s38
      %s160 = ssub.s32 %s27, %s34
      %s161 = sor.u32 %s159, %s160
      %p162 = scmp.eq.s32.totalorder %s161, 0
      %s164 = sadd.s32 %s163, 1
      %s165 = scalar_select %p162, %s163, %s164
      %p168 = pneg %p162
      %p169 = scmp.eq.s32.totalorder %s19, 1
      %p170 = por %p168, %p169
      %p171 = scmp.ne.s32.totalorder %s163, %s166
      %p172 = scmp.eq.s32.totalorder %s19, 0
      %p173 = por %p171, %p172
      %p174 = scmp.ne.s32.totalorder %s163, %s166
      %p175 = scmp.eq.s32.totalorder %s24, 1
      %p176 = por %p174, %p175
      %p177 = scmp.ne.s32.totalorder %s166, %s167
      %p178 = scmp.eq.s32.totalorder %s24, 0
      %p179 = por %p177, %p178
      %p180 = scmp.ne.s32.totalorder %s166, %s167
      %p181 = scmp.eq.s32.totalorder %s25, 1
      %p182 = por %p180, %p181
      %p184 = scmp.ne.s32.totalorder %s167, %s183
      %p185 = scmp.eq.s32.totalorder %s25, 0
      %p186 = por %p184, %p185
      %p187 = scmp.le.s32.totalorder 1, %s19
      %p188 = scmp.lt.s32.totalorder %s19, 3
      %p189 = pnand %p187, %p188
      %p190 = pneg %p189
      // Predicated region
      $region9: #{tpu_custom_call.1} parent=5 // pred_check
        _
      $region10: #{tpu_custom_call.1} parent=5 // pred_check_branch
        %192 = sbr.rel (%p189) target = $region12
      $region11: #{tpu_custom_call.1} parent=5 // pred_region
        %s193 = ssub.s32 %s19, 1
        // Predicated region
        $region13: #{tpu_custom_call.1} parent=11 // pred_check
          %p194 = pneg %p57
        $region14: #{tpu_custom_call.1} parent=11 // pred_check_branch
          %196 = sbr.rel (%p194) target = $region16
        $region15: #{tpu_custom_call.1} parent=11 // pred_region
          %s197 = smul.u32 32, %s28
          %199 = vsyncadd [#allocation3], 0
          %s200 = smul.addr %s197, 2
          %s201 = smul.addr %s200, 8
          %s202 = scalar_lea.hbm %s0, %s201
          %s203 = sshll.u32 %s202, 4
          %s204 = int_to_ptr.hbm [resolvable:$true] %s203
          %s205 = sshll.u32 [#allocation2], 4
          %s206 = int_to_ptr.vmem [resolvable:$true] %s205
          %211 = dma.hbm_to_vmem [thread:$0]  %s204, 8192, %s206, [#allocation3], 256, 256, 16
        $region16: #{tpu_custom_call.1} parent=11 // pred_fallthru
          _
        // Predicated region
        $region17: #{tpu_custom_call.1} parent=11 // pred_check
          %p212 = pneg %p78
        $region18: #{tpu_custom_call.1} parent=11 // pred_check_branch
          %214 = sbr.rel (%p212) target = $region20
        $region19: #{tpu_custom_call.1} parent=11 // pred_region
          %216 = vsyncadd [#allocation6], 0
          %s218 = sshll.u32 %s1, 4
          %s219 = int_to_ptr.hbm [resolvable:$true] %s218
          %s220 = sshll.u32 [#allocation5], 4
          %s221 = int_to_ptr.vmem [resolvable:$true] %s220
          %223 = dma.hbm_to_vmem [thread:$0]  %s219, 32, %s221, [#allocation6]
        $region20: #{tpu_custom_call.1} parent=11 // pred_fallthru
          _
        // Predicated region
        $region21: #{tpu_custom_call.1} parent=11 // pred_check
          %p224 = pneg %p99
        $region22: #{tpu_custom_call.1} parent=11 // pred_check_branch
          %226 = sbr.rel (%p224) target = $region24
        $region23: #{tpu_custom_call.1} parent=11 // pred_region
          %228 = vsyncadd [#allocation6], 0
          %s230 = sshll.u32 %s2, 4
          %s231 = int_to_ptr.hbm [resolvable:$true] %s230
          %s232 = sshll.u32 [#allocation7], 4
          %s233 = int_to_ptr.vmem [resolvable:$true] %s232
          %235 = dma.hbm_to_vmem [thread:$0]  %s231, 32, %s233, [#allocation6]
        $region24: #{tpu_custom_call.1} parent=11 // pred_fallthru
          _
      $region12: #{tpu_custom_call.1} parent=5 // pred_fallthru
        _
      %p236 = scmp.lt.s32.totalorder %s19, 2
      // Predicated region
      $region25: #{tpu_custom_call.1} parent=5 // pred_check
        %p237 = pneg %p236
      $region26: #{tpu_custom_call.1} parent=5 // pred_check_branch
        %239 = sbr.rel (%p237) target = $region28
      $region27: #{tpu_custom_call.1} parent=5 // pred_region
        // Predicated region
        $region29: #{tpu_custom_call.1} parent=27 // pred_check
          %p240 = pneg %p119
        $region30: #{tpu_custom_call.1} parent=27 // pred_check_branch
          %242 = sbr.rel (%p240) target = $region32
        $region31: #{tpu_custom_call.1} parent=27 // pred_region
          %s243 = sand.u32 %s19, 1
          %s244 = scalar_lea.sflag [#allocation9], %s243
          %s245 = sand.u32 %s109, 1
          %s246 = smul.addr %s245, 256
          %s247 = scalar_lea.vmem [#allocation8], %s246
          %s248 = smul.u32 2, %s27
          %250 = vsyncadd %s244, 0
          %s251 = smul.addr %s248, 4
          %s252 = scalar_lea.hbm %s3, %s251
          %s253 = sshll.u32 %s252, 4
          %s254 = int_to_ptr.hbm [resolvable:$true] %s253
          %s255 = sshll.u32 %s247, 4
          %s256 = int_to_ptr.vmem [resolvable:$true] %s255
          %261 = dma.hbm_to_vmem [thread:$0]  %s254, 4096, %s256, %s244, 256, 128, 8
        $region32: #{tpu_custom_call.1} parent=27 // pred_fallthru
          _
        // Predicated region
        $region33: #{tpu_custom_call.1} parent=27 // pred_check
          %p262 = pneg %p145
        $region34: #{tpu_custom_call.1} parent=27 // pred_check_branch
          %264 = sbr.rel (%p262) target = $region36
        $region35: #{tpu_custom_call.1} parent=27 // pred_region
          %s265 = sand.u32 %s19, 1
          %s266 = scalar_lea.sflag [#allocation9], %s265
          %s267 = sand.u32 %s135, 1
          %s268 = smul.addr %s267, 2
          %s269 = scalar_lea.vmem [#allocation10], %s268
          %s270 = smul.u32 2, %s27
          %272 = vsyncadd %s266, 0
          %s273 = scalar_lea.hbm %s4, %s270
          %s275 = sshll.u32 %s273, 4
          %s276 = int_to_ptr.hbm [resolvable:$true] %s275
          %s277 = sshll.u32 %s269, 4
          %s278 = int_to_ptr.vmem [resolvable:$true] %s277
          %280 = dma.hbm_to_vmem [thread:$0]  %s276, 32, %s278, %s266
        $region36: #{tpu_custom_call.1} parent=27 // pred_fallthru
          _
      $region28: #{tpu_custom_call.1} parent=5 // pred_fallthru
        _
      %p281 = scmp.le.s32.totalorder 1, %s19
      %p282 = scmp.lt.s32.totalorder %s19, 3
      %p283 = pnand %p281, %p282
      %p284 = pneg %p283
      // Predicated region
      $region37: #{tpu_custom_call.1} parent=5 // pred_check
        _
      $region38: #{tpu_custom_call.1} parent=5 // pred_check_branch
        %286 = sbr.rel (%p283) target = $region40
      $region39: #{tpu_custom_call.1} parent=5 // pred_region
        %s287 = ssub.s32 %s19, 1
        // Predicated region
        $region41: #{tpu_custom_call.1} parent=39 // pred_check
          %p288 = pneg %p57
        $region42: #{tpu_custom_call.1} parent=39 // pred_check_branch
          %290 = sbr.rel (%p288) target = $region44
        $region43: #{tpu_custom_call.1} parent=39 // pred_region
          %292 = dma.done [#allocation3], 8192
        $region44: #{tpu_custom_call.1} parent=39 // pred_fallthru
          _
        // Predicated region
        $region45: #{tpu_custom_call.1} parent=39 // pred_check
          %p293 = pneg %p78
        $region46: #{tpu_custom_call.1} parent=39 // pred_check_branch
          %295 = sbr.rel (%p293) target = $region48
        $region47: #{tpu_custom_call.1} parent=39 // pred_region
          %297 = dma.done [#allocation6], 32
        $region48: #{tpu_custom_call.1} parent=39 // pred_fallthru
          _
        // Predicated region
        $region49: #{tpu_custom_call.1} parent=39 // pred_check
          %p298 = pneg %p99
        $region50: #{tpu_custom_call.1} parent=39 // pred_check_branch
          %300 = sbr.rel (%p298) target = $region52
        $region51: #{tpu_custom_call.1} parent=39 // pred_region
          %302 = dma.done [#allocation6], 32
        $region52: #{tpu_custom_call.1} parent=39 // pred_fallthru
          _
        %s303 = sand.u32 %s24, 1
        %s304 = scalar_lea.sflag [#allocation9], %s303
        %s305 = sand.u32 %s112, 1
        %s306 = smul.addr %s305, 256
        %s307 = scalar_lea.vmem [#allocation8], %s306
        // Predicated region
        $region53: #{tpu_custom_call.1} parent=39 // pred_check
          %p308 = pneg %p125
        $region54: #{tpu_custom_call.1} parent=39 // pred_check_branch
          %310 = sbr.rel (%p308) target = $region56
        $region55: #{tpu_custom_call.1} parent=39 // pred_region
          %312 = dma.done %s304, 4096
        $region56: #{tpu_custom_call.1} parent=39 // pred_fallthru
          _
        %s313 = sand.u32 %s24, 1
        %s314 = scalar_lea.sflag [#allocation9], %s313
        %s315 = sand.u32 %s138, 1
        %s316 = smul.addr %s315, 2
        %s317 = scalar_lea.vmem [#allocation10], %s316
        // Predicated region
        $region57: #{tpu_custom_call.1} parent=39 // pred_check
          %p318 = pneg %p151
        $region58: #{tpu_custom_call.1} parent=39 // pred_check_branch
          %320 = sbr.rel (%p318) target = $region60
        $region59: #{tpu_custom_call.1} parent=39 // pred_region
          %322 = dma.done %s314, 32
        $region60: #{tpu_custom_call.1} parent=39 // pred_fallthru
          _
        %p323 = pneg %p57
        %p324 = pneg %p54
        %p325 = pneg %p78
        %p326 = pneg %p75
        %p327 = pneg %p99
        %p328 = pneg %p96
        %s329 = sand.u32 %s24, 1
        %s330 = scalar_lea.sflag [#allocation9], %s329
        %s331 = sand.u32 %s112, 1
        %s332 = smul.addr %s331, 256
        %s333 = scalar_lea.vmem [#allocation8], %s332
        %p334 = pneg %p125
        %p335 = pneg %p122
        %s336 = sand.u32 %s24, 1
        %s337 = scalar_lea.sflag [#allocation9], %s336
        %s338 = sand.u32 %s138, 1
        %s339 = smul.addr %s338, 2
        %s340 = scalar_lea.vmem [#allocation10], %s339
        %p341 = pneg %p151
        %p342 = pneg %p148
        %p343 = pneg %p179
        %p344 = pneg %p176
        %s345 = sand.u32 %s166, 1
        %s346 = scalar_lea.sflag [#allocation4], %s345
        %s347 = sand.u32 %s166, 1
        %s348 = smul.addr %s347, 512
        %s349 = scalar_lea.vmem [#allocation11], %s348
        %s350 = smul.u32 32, %s28
        %s351 = smul.u32 2, %s29
        %s352 = smul.u32 2, %s29
        %s353 = smul.u32 32, %s28
        %s354 = smul.u32 2, %s29
        %v355 = vld [vmem:[#allocation2] sm:$0xff]
        %v356 = vld [vmem:[#allocation2 + $0x8] sm:$0xff]
        %v357 = vld [vmem:[#allocation2 + $0x10] sm:$0xff]
        %v358 = vld [vmem:[#allocation2 + $0x18] sm:$0xff]
        %v359 = vld [vmem:[#allocation2 + $0x20] sm:$0xff]
        %v360 = vld [vmem:[#allocation2 + $0x28] sm:$0xff]
        %v361 = vld [vmem:[#allocation2 + $0x30] sm:$0xff]
        %v362 = vld [vmem:[#allocation2 + $0x38] sm:$0xff]
        %v363 = vld [vmem:[#allocation2 + $0x40] sm:$0xff]
        %v364 = vld [vmem:[#allocation2 + $0x48] sm:$0xff]
        %v365 = vld [vmem:[#allocation2 + $0x50] sm:$0xff]
        %v366 = vld [vmem:[#allocation2 + $0x58] sm:$0xff]
        %v367 = vld [vmem:[#allocation2 + $0x60] sm:$0xff]
        %v368 = vld [vmem:[#allocation2 + $0x68] sm:$0xff]
        %v369 = vld [vmem:[#allocation2 + $0x70] sm:$0xff]
        %v370 = vld [vmem:[#allocation2 + $0x78] sm:$0xff]
        %v371 = vld [vmem:[#allocation2 + $0x80] sm:$0xff]
        %v372 = vld [vmem:[#allocation2 + $0x88] sm:$0xff]
        %v373 = vld [vmem:[#allocation2 + $0x90] sm:$0xff]
        %v374 = vld [vmem:[#allocation2 + $0x98] sm:$0xff]
        %v375 = vld [vmem:[#allocation2 + $0xa0] sm:$0xff]
        %v376 = vld [vmem:[#allocation2 + $0xa8] sm:$0xff]
        %v377 = vld [vmem:[#allocation2 + $0xb0] sm:$0xff]
        %v378 = vld [vmem:[#allocation2 + $0xb8] sm:$0xff]
        %v379 = vld [vmem:[#allocation2 + $0xc0] sm:$0xff]
        %v380 = vld [vmem:[#allocation2 + $0xc8] sm:$0xff]
        %v381 = vld [vmem:[#allocation2 + $0xd0] sm:$0xff]
        %v382 = vld [vmem:[#allocation2 + $0xd8] sm:$0xff]
        %v383 = vld [vmem:[#allocation2 + $0xe0] sm:$0xff]
        %v384 = vld [vmem:[#allocation2 + $0xe8] sm:$0xff]
        %v385 = vld [vmem:[#allocation2 + $0xf0] sm:$0xff]
        %v386 = vld [vmem:[#allocation2 + $0xf8] sm:$0xff]
        %v387 = vld [vmem:[#allocation2 + $0x100] sm:$0xff]
        %v388 = vld [vmem:[#allocation2 + $0x108] sm:$0xff]
        %v389 = vld [vmem:[#allocation2 + $0x110] sm:$0xff]
        %v390 = vld [vmem:[#allocation2 + $0x118] sm:$0xff]
        %v391 = vld [vmem:[#allocation2 + $0x120] sm:$0xff]
        %v392 = vld [vmem:[#allocation2 + $0x128] sm:$0xff]
        %v393 = vld [vmem:[#allocation2 + $0x130] sm:$0xff]
        %v394 = vld [vmem:[#allocation2 + $0x138] sm:$0xff]
        %v395 = vld [vmem:[#allocation2 + $0x140] sm:$0xff]
        %v396 = vld [vmem:[#allocation2 + $0x148] sm:$0xff]
        %v397 = vld [vmem:[#allocation2 + $0x150] sm:$0xff]
        %v398 = vld [vmem:[#allocation2 + $0x158] sm:$0xff]
        %v399 = vld [vmem:[#allocation2 + $0x160] sm:$0xff]
        %v400 = vld [vmem:[#allocation2 + $0x168] sm:$0xff]
        %v401 = vld [vmem:[#allocation2 + $0x170] sm:$0xff]
        %v402 = vld [vmem:[#allocation2 + $0x178] sm:$0xff]
        %v403 = vld [vmem:[#allocation2 + $0x180] sm:$0xff]
        %v404 = vld [vmem:[#allocation2 + $0x188] sm:$0xff]
        %v405 = vld [vmem:[#allocation2 + $0x190] sm:$0xff]
        %v406 = vld [vmem:[#allocation2 + $0x198] sm:$0xff]
        %v407 = vld [vmem:[#allocation2 + $0x1a0] sm:$0xff]
        %v408 = vld [vmem:[#allocation2 + $0x1a8] sm:$0xff]
        %v409 = vld [vmem:[#allocation2 + $0x1b0] sm:$0xff]
        %v410 = vld [vmem:[#allocation2 + $0x1b8] sm:$0xff]
        %v411 = vld [vmem:[#allocation2 + $0x1c0] sm:$0xff]
        %v412 = vld [vmem:[#allocation2 + $0x1c8] sm:$0xff]
        %v413 = vld [vmem:[#allocation2 + $0x1d0] sm:$0xff]
        %v414 = vld [vmem:[#allocation2 + $0x1d8] sm:$0xff]
        %v415 = vld [vmem:[#allocation2 + $0x1e0] sm:$0xff]
        %v416 = vld [vmem:[#allocation2 + $0x1e8] sm:$0xff]
        %v417 = vld [vmem:[#allocation2 + $0x1f0] sm:$0xff]
        %v418 = vld [vmem:[#allocation2 + $0x1f8] sm:$0xff]
        %v419 = vadd.f32 %v355, %v356
        %420 = vadd.xlane.f32.xlu0 %v419
        %v421 = vpop.xlane.xlu0 %420
        %v422 = vadd.f32 %v357, %v358
        %423 = vadd.xlane.f32.xlu0 %v422
        %v424 = vpop.xlane.xlu0 %423
        %v425 = vadd.f32 %v359, %v360
        %426 = vadd.xlane.f32.xlu0 %v425
        %v427 = vpop.xlane.xlu0 %426
        %v428 = vadd.f32 %v361, %v362
        %429 = vadd.xlane.f32.xlu0 %v428
        %v430 = vpop.xlane.xlu0 %429
        %v431 = vadd.f32 %v363, %v364
        %432 = vadd.xlane.f32.xlu0 %v431
        %v433 = vpop.xlane.xlu0 %432
        %v434 = vadd.f32 %v365, %v366
        %435 = vadd.xlane.f32.xlu0 %v434
        %v436 = vpop.xlane.xlu0 %435
        %v437 = vadd.f32 %v367, %v368
        %438 = vadd.xlane.f32.xlu0 %v437
        %v439 = vpop.xlane.xlu0 %438
        %v440 = vadd.f32 %v369, %v370
        %441 = vadd.xlane.f32.xlu0 %v440
        %v442 = vpop.xlane.xlu0 %441
        %v443 = vadd.f32 %v371, %v372
        %444 = vadd.xlane.f32.xlu0 %v443
        %v445 = vpop.xlane.xlu0 %444
        %v446 = vadd.f32 %v373, %v374
        %447 = vadd.xlane.f32.xlu0 %v446
        %v448 = vpop.xlane.xlu0 %447
        %v449 = vadd.f32 %v375, %v376
        %450 = vadd.xlane.f32.xlu0 %v449
        %v451 = vpop.xlane.xlu0 %450
        %v452 = vadd.f32 %v377, %v378
        %453 = vadd.xlane.f32.xlu0 %v452
        %v454 = vpop.xlane.xlu0 %453
        %v455 = vadd.f32 %v379, %v380
        %456 = vadd.xlane.f32.xlu0 %v455
        %v457 = vpop.xlane.xlu0 %456
        %v458 = vadd.f32 %v381, %v382
        %459 = vadd.xlane.f32.xlu0 %v458
        %v460 = vpop.xlane.xlu0 %459
        %v461 = vadd.f32 %v383, %v384
        %462 = vadd.xlane.f32.xlu0 %v461
        %v463 = vpop.xlane.xlu0 %462
        %v464 = vadd.f32 %v385, %v386
        %465 = vadd.xlane.f32.xlu0 %v464
        %v466 = vpop.xlane.xlu0 %465
        %v467 = vadd.f32 %v387, %v388
        %468 = vadd.xlane.f32.xlu0 %v467
        %v469 = vpop.xlane.xlu0 %468
        %v470 = vadd.f32 %v389, %v390
        %471 = vadd.xlane.f32.xlu0 %v470
        %v472 = vpop.xlane.xlu0 %471
        %v473 = vadd.f32 %v391, %v392
        %474 = vadd.xlane.f32.xlu0 %v473
        %v475 = vpop.xlane.xlu0 %474
        %v476 = vadd.f32 %v393, %v394
        %477 = vadd.xlane.f32.xlu0 %v476
        %v478 = vpop.xlane.xlu0 %477
        %v479 = vadd.f32 %v395, %v396
        %480 = vadd.xlane.f32.xlu0 %v479
        %v481 = vpop.xlane.xlu0 %480
        %v482 = vadd.f32 %v397, %v398
        %483 = vadd.xlane.f32.xlu0 %v482
        %v484 = vpop.xlane.xlu0 %483
        %v485 = vadd.f32 %v399, %v400
        %486 = vadd.xlane.f32.xlu0 %v485
        %v487 = vpop.xlane.xlu0 %486
        %v488 = vadd.f32 %v401, %v402
        %489 = vadd.xlane.f32.xlu0 %v488
        %v490 = vpop.xlane.xlu0 %489
        %v491 = vadd.f32 %v403, %v404
        %492 = vadd.xlane.f32.xlu0 %v491
        %v493 = vpop.xlane.xlu0 %492
        %v494 = vadd.f32 %v405, %v406
        %495 = vadd.xlane.f32.xlu0 %v494
        %v496 = vpop.xlane.xlu0 %495
        %v497 = vadd.f32 %v407, %v408
        %498 = vadd.xlane.f32.xlu0 %v497
        %v499 = vpop.xlane.xlu0 %498
        %v500 = vadd.f32 %v409, %v410
        %501 = vadd.xlane.f32.xlu0 %v500
        %v502 = vpop.xlane.xlu0 %501
        %v503 = vadd.f32 %v411, %v412
        %504 = vadd.xlane.f32.xlu0 %v503
        %v505 = vpop.xlane.xlu0 %504
        %v506 = vadd.f32 %v413, %v414
        %507 = vadd.xlane.f32.xlu0 %v506
        %v508 = vpop.xlane.xlu0 %507
        %v509 = vadd.f32 %v415, %v416
        %510 = vadd.xlane.f32.xlu0 %v509
        %v511 = vpop.xlane.xlu0 %510
        %v512 = vadd.f32 %v417, %v418
        %513 = vadd.xlane.f32.xlu0 %v512
        %v514 = vpop.xlane.xlu0 %513
        %v515 = vrcp.pop 256.0
        %v516 = vmul.f32 256.0, %v515
        %v517 = vsub.f32 1.0, %v516
        %v518 = vmul.f32 %v515, %v517
        %v519 = vadd.f32 %v515, %v518
        %vm520 = vweird.f32 %v515
        %v521 = vsel %vm520, %v515, %v519
        %v522 = vmul.f32 %v421, %v521
        %v523 = vmul.f32 %v424, %v521
        %v524 = vmul.f32 %v427, %v521
        %v525 = vmul.f32 %v430, %v521
        %v526 = vmul.f32 %v433, %v521
        %v527 = vmul.f32 %v436, %v521
        %v528 = vmul.f32 %v439, %v521
        %v529 = vmul.f32 %v442, %v521
        %v530 = vmul.f32 %v445, %v521
        %v531 = vmul.f32 %v448, %v521
        %v532 = vmul.f32 %v451, %v521
        %v533 = vmul.f32 %v454, %v521
        %v534 = vmul.f32 %v457, %v521
        %v535 = vmul.f32 %v460, %v521
        %v536 = vmul.f32 %v463, %v521
        %v537 = vmul.f32 %v466, %v521
        %v538 = vmul.f32 %v469, %v521
        %v539 = vmul.f32 %v472, %v521
        %v540 = vmul.f32 %v475, %v521
        %v541 = vmul.f32 %v478, %v521
        %v542 = vmul.f32 %v481, %v521
        %v543 = vmul.f32 %v484, %v521
        %v544 = vmul.f32 %v487, %v521
        %v545 = vmul.f32 %v490, %v521
        %v546 = vmul.f32 %v493, %v521
        %v547 = vmul.f32 %v496, %v521
        %v548 = vmul.f32 %v499, %v521
        %v549 = vmul.f32 %v502, %v521
        %v550 = vmul.f32 %v505, %v521
        %v551 = vmul.f32 %v508, %v521
        %v552 = vmul.f32 %v511, %v521
        %v553 = vmul.f32 %v514, %v521
        %v554 = vsub.f32 %v355, %v522
        %v555 = vsub.f32 %v356, %v522
        %v556 = vsub.f32 %v357, %v523
        %v557 = vsub.f32 %v358, %v523
        %v558 = vsub.f32 %v359, %v524
        %v559 = vsub.f32 %v360, %v524
        %v560 = vsub.f32 %v361, %v525
        %v561 = vsub.f32 %v362, %v525
        %v562 = vsub.f32 %v363, %v526
        %v563 = vsub.f32 %v364, %v526
        %v564 = vsub.f32 %v365, %v527
        %v565 = vsub.f32 %v366, %v527
        %v566 = vsub.f32 %v367, %v528
        %v567 = vsub.f32 %v368, %v528
        %v568 = vsub.f32 %v369, %v529
        %v569 = vsub.f32 %v370, %v529
        %v570 = vsub.f32 %v371, %v530
        %v571 = vsub.f32 %v372, %v530
        %v572 = vsub.f32 %v373, %v531
        %v573 = vsub.f32 %v374, %v531
        %v574 = vsub.f32 %v375, %v532
        %v575 = vsub.f32 %v376, %v532
        %v576 = vsub.f32 %v377, %v533
        %v577 = vsub.f32 %v378, %v533
        %v578 = vsub.f32 %v379, %v534
        %v579 = vsub.f32 %v380, %v534
        %v580 = vsub.f32 %v381, %v535
        %v581 = vsub.f32 %v382, %v535
        %v582 = vsub.f32 %v383, %v536
        %v583 = vsub.f32 %v384, %v536
        %v584 = vsub.f32 %v385, %v537
        %v585 = vsub.f32 %v386, %v537
        %v586 = vsub.f32 %v387, %v538
        %v587 = vsub.f32 %v388, %v538
        %v588 = vsub.f32 %v389, %v539
        %v589 = vsub.f32 %v390, %v539
        %v590 = vsub.f32 %v391, %v540
        %v591 = vsub.f32 %v392, %v540
        %v592 = vsub.f32 %v393, %v541
        %v593 = vsub.f32 %v394, %v541
        %v594 = vsub.f32 %v395, %v542
        %v595 = vsub.f32 %v396, %v542
        %v596 = vsub.f32 %v397, %v543
        %v597 = vsub.f32 %v398, %v543
        %v598 = vsub.f32 %v399, %v544
        %v599 = vsub.f32 %v400, %v544
        %v600 = vsub.f32 %v401, %v545
        %v601 = vsub.f32 %v402, %v545
        %v602 = vsub.f32 %v403, %v546
        %v603 = vsub.f32 %v404, %v546
        %v604 = vsub.f32 %v405, %v547
        %v605 = vsub.f32 %v406, %v547
        %v606 = vsub.f32 %v407, %v548
        %v607 = vsub.f32 %v408, %v548
        %v608 = vsub.f32 %v409, %v549
        %v609 = vsub.f32 %v410, %v549
        %v610 = vsub.f32 %v411, %v550
        %v611 = vsub.f32 %v412, %v550
        %v612 = vsub.f32 %v413, %v551
        %v613 = vsub.f32 %v414, %v551
        %v614 = vsub.f32 %v415, %v552
        %v615 = vsub.f32 %v416, %v552
        %v616 = vsub.f32 %v417, %v553
        %v617 = vsub.f32 %v418, %v553
        %v618 = vmul.f32 %v554, %v554
        %v619 = vmul.f32 %v555, %v555
        %v620 = vmul.f32 %v556, %v556
        %v621 = vmul.f32 %v557, %v557
        %v622 = vmul.f32 %v558, %v558
        %v623 = vmul.f32 %v559, %v559
        %v624 = vmul.f32 %v560, %v560
        %v625 = vmul.f32 %v561, %v561
        %v626 = vmul.f32 %v562, %v562
        %v627 = vmul.f32 %v563, %v563
        %v628 = vmul.f32 %v564, %v564
        %v629 = vmul.f32 %v565, %v565
        %v630 = vmul.f32 %v566, %v566
        %v631 = vmul.f32 %v567, %v567
        %v632 = vmul.f32 %v568, %v568
        %v633 = vmul.f32 %v569, %v569
        %v634 = vmul.f32 %v570, %v570
        %v635 = vmul.f32 %v571, %v571
        %v636 = vmul.f32 %v572, %v572
        %v637 = vmul.f32 %v573, %v573
        %v638 = vmul.f32 %v574, %v574
        %v639 = vmul.f32 %v575, %v575
        %v640 = vmul.f32 %v576, %v576
        %v641 = vmul.f32 %v577, %v577
        %v642 = vmul.f32 %v578, %v578
        %v643 = vmul.f32 %v579, %v579
        %v644 = vmul.f32 %v580, %v580
        %v645 = vmul.f32 %v581, %v581
        %v646 = vmul.f32 %v582, %v582
        %v647 = vmul.f32 %v583, %v583
        %v648 = vmul.f32 %v584, %v584
        %v649 = vmul.f32 %v585, %v585
        %v650 = vmul.f32 %v586, %v586
        %v651 = vmul.f32 %v587, %v587
        %v652 = vmul.f32 %v588, %v588
        %v653 = vmul.f32 %v589, %v589
        %v654 = vmul.f32 %v590, %v590
        %v655 = vmul.f32 %v591, %v591
        %v656 = vmul.f32 %v592, %v592
        %v657 = vmul.f32 %v593, %v593
        %v658 = vmul.f32 %v594, %v594
        %v659 = vmul.f32 %v595, %v595
        %v660 = vmul.f32 %v596, %v596
        %v661 = vmul.f32 %v597, %v597
        %v662 = vmul.f32 %v598, %v598
        %v663 = vmul.f32 %v599, %v599
        %v664 = vmul.f32 %v600, %v600
        %v665 = vmul.f32 %v601, %v601
        %v666 = vmul.f32 %v602, %v602
        %v667 = vmul.f32 %v603, %v603
        %v668 = vmul.f32 %v604, %v604
        %v669 = vmul.f32 %v605, %v605
        %v670 = vmul.f32 %v606, %v606
        %v671 = vmul.f32 %v607, %v607
        %v672 = vmul.f32 %v608, %v608
        %v673 = vmul.f32 %v609, %v609
        %v674 = vmul.f32 %v610, %v610
        %v675 = vmul.f32 %v611, %v611
        %v676 = vmul.f32 %v612, %v612
        %v677 = vmul.f32 %v613, %v613
        %v678 = vmul.f32 %v614, %v614
        %v679 = vmul.f32 %v615, %v615
        %v680 = vmul.f32 %v616, %v616
        %v681 = vmul.f32 %v617, %v617
        %v682 = vadd.f32 %v618, %v619
        %683 = vadd.xlane.f32.xlu0 %v682
        %v684 = vpop.xlane.xlu0 %683
        %v685 = vadd.f32 %v620, %v621
        %686 = vadd.xlane.f32.xlu0 %v685
        %v687 = vpop.xlane.xlu0 %686
        %v688 = vadd.f32 %v622, %v623
        %689 = vadd.xlane.f32.xlu0 %v688
        %v690 = vpop.xlane.xlu0 %689
        %v691 = vadd.f32 %v624, %v625
        %692 = vadd.xlane.f32.xlu0 %v691
        %v693 = vpop.xlane.xlu0 %692
        %v694 = vadd.f32 %v626, %v627
        %695 = vadd.xlane.f32.xlu0 %v694
        %v696 = vpop.xlane.xlu0 %695
        %v697 = vadd.f32 %v628, %v629
        %698 = vadd.xlane.f32.xlu0 %v697
        %v699 = vpop.xlane.xlu0 %698
        %v700 = vadd.f32 %v630, %v631
        %701 = vadd.xlane.f32.xlu0 %v700
        %v702 = vpop.xlane.xlu0 %701
        %v703 = vadd.f32 %v632, %v633
        %704 = vadd.xlane.f32.xlu0 %v703
        %v705 = vpop.xlane.xlu0 %704
        %v706 = vadd.f32 %v634, %v635
        %707 = vadd.xlane.f32.xlu0 %v706
        %v708 = vpop.xlane.xlu0 %707
        %v709 = vadd.f32 %v636, %v637
        %710 = vadd.xlane.f32.xlu0 %v709
        %v711 = vpop.xlane.xlu0 %710
        %v712 = vadd.f32 %v638, %v639
        %713 = vadd.xlane.f32.xlu0 %v712
        %v714 = vpop.xlane.xlu0 %713
        %v715 = vadd.f32 %v640, %v641
        %716 = vadd.xlane.f32.xlu0 %v715
        %v717 = vpop.xlane.xlu0 %716
        %v718 = vadd.f32 %v642, %v643
        %719 = vadd.xlane.f32.xlu0 %v718
        %v720 = vpop.xlane.xlu0 %719
        %v721 = vadd.f32 %v644, %v645
        %722 = vadd.xlane.f32.xlu0 %v721
        %v723 = vpop.xlane.xlu0 %722
        %v724 = vadd.f32 %v646, %v647
        %725 = vadd.xlane.f32.xlu0 %v724
        %v726 = vpop.xlane.xlu0 %725
        %v727 = vadd.f32 %v648, %v649
        %728 = vadd.xlane.f32.xlu0 %v727
        %v729 = vpop.xlane.xlu0 %728
        %v730 = vadd.f32 %v650, %v651
        %731 = vadd.xlane.f32.xlu0 %v730
        %v732 = vpop.xlane.xlu0 %731
        %v733 = vadd.f32 %v652, %v653
        %734 = vadd.xlane.f32.xlu0 %v733
        %v735 = vpop.xlane.xlu0 %734
        %v736 = vadd.f32 %v654, %v655
        %737 = vadd.xlane.f32.xlu0 %v736
        %v738 = vpop.xlane.xlu0 %737
        %v739 = vadd.f32 %v656, %v657
        %740 = vadd.xlane.f32.xlu0 %v739
        %v741 = vpop.xlane.xlu0 %740
        %v742 = vadd.f32 %v658, %v659
        %743 = vadd.xlane.f32.xlu0 %v742
        %v744 = vpop.xlane.xlu0 %743
        %v745 = vadd.f32 %v660, %v661
        %746 = vadd.xlane.f32.xlu0 %v745
        %v747 = vpop.xlane.xlu0 %746
        %v748 = vadd.f32 %v662, %v663
        %749 = vadd.xlane.f32.xlu0 %v748
        %v750 = vpop.xlane.xlu0 %749
        %v751 = vadd.f32 %v664, %v665
        %752 = vadd.xlane.f32.xlu0 %v751
        %v753 = vpop.xlane.xlu0 %752
        %v754 = vadd.f32 %v666, %v667
        %755 = vadd.xlane.f32.xlu0 %v754
        %v756 = vpop.xlane.xlu0 %755
        %v757 = vadd.f32 %v668, %v669
        %758 = vadd.xlane.f32.xlu0 %v757
        %v759 = vpop.xlane.xlu0 %758
        %v760 = vadd.f32 %v670, %v671
        %761 = vadd.xlane.f32.xlu0 %v760
        %v762 = vpop.xlane.xlu0 %761
        %v763 = vadd.f32 %v672, %v673
        %764 = vadd.xlane.f32.xlu0 %v763
        %v765 = vpop.xlane.xlu0 %764
        %v766 = vadd.f32 %v674, %v675
        %767 = vadd.xlane.f32.xlu0 %v766
        %v768 = vpop.xlane.xlu0 %767
        %v769 = vadd.f32 %v676, %v677
        %770 = vadd.xlane.f32.xlu0 %v769
        %v771 = vpop.xlane.xlu0 %770
        %v772 = vadd.f32 %v678, %v679
        %773 = vadd.xlane.f32.xlu0 %v772
        %v774 = vpop.xlane.xlu0 %773
        %v775 = vadd.f32 %v680, %v681
        %776 = vadd.xlane.f32.xlu0 %v775
        %v777 = vpop.xlane.xlu0 %776
        %v778 = vmul.f32 %v684, %v521
        %v779 = vmul.f32 %v687, %v521
        %v780 = vmul.f32 %v690, %v521
        %v781 = vmul.f32 %v693, %v521
        %v782 = vmul.f32 %v696, %v521
        %v783 = vmul.f32 %v699, %v521
        %v784 = vmul.f32 %v702, %v521
        %v785 = vmul.f32 %v705, %v521
        %v786 = vmul.f32 %v708, %v521
        %v787 = vmul.f32 %v711, %v521
        %v788 = vmul.f32 %v714, %v521
        %v789 = vmul.f32 %v717, %v521
        %v790 = vmul.f32 %v720, %v521
        %v791 = vmul.f32 %v723, %v521
        %v792 = vmul.f32 %v726, %v521
        %v793 = vmul.f32 %v729, %v521
        %v794 = vmul.f32 %v732, %v521
        %v795 = vmul.f32 %v735, %v521
        %v796 = vmul.f32 %v738, %v521
        %v797 = vmul.f32 %v741, %v521
        %v798 = vmul.f32 %v744, %v521
        %v799 = vmul.f32 %v747, %v521
        %v800 = vmul.f32 %v750, %v521
        %v801 = vmul.f32 %v753, %v521
        %v802 = vmul.f32 %v756, %v521
        %v803 = vmul.f32 %v759, %v521
        %v804 = vmul.f32 %v762, %v521
        %v805 = vmul.f32 %v765, %v521
        %v806 = vmul.f32 %v768, %v521
        %v807 = vmul.f32 %v771, %v521
        %v808 = vmul.f32 %v774, %v521
        %v809 = vmul.f32 %v777, %v521
        %v810 = vadd.f32 %v778, 1e-05
        %v811 = vadd.f32 %v779, 1e-05
        %v812 = vadd.f32 %v780, 1e-05
        %v813 = vadd.f32 %v781, 1e-05
        %v814 = vadd.f32 %v782, 1e-05
        %v815 = vadd.f32 %v783, 1e-05
        %v816 = vadd.f32 %v784, 1e-05
        %v817 = vadd.f32 %v785, 1e-05
        %v818 = vadd.f32 %v786, 1e-05
        %v819 = vadd.f32 %v787, 1e-05
        %v820 = vadd.f32 %v788, 1e-05
        %v821 = vadd.f32 %v789, 1e-05
        %v822 = vadd.f32 %v790, 1e-05
        %v823 = vadd.f32 %v791, 1e-05
        %v824 = vadd.f32 %v792, 1e-05
        %v825 = vadd.f32 %v793, 1e-05
        %v826 = vadd.f32 %v794, 1e-05
        %v827 = vadd.f32 %v795, 1e-05
        %v828 = vadd.f32 %v796, 1e-05
        %v829 = vadd.f32 %v797, 1e-05
        %v830 = vadd.f32 %v798, 1e-05
        %v831 = vadd.f32 %v799, 1e-05
        %v832 = vadd.f32 %v800, 1e-05
        %v833 = vadd.f32 %v801, 1e-05
        %v834 = vadd.f32 %v802, 1e-05
        %v835 = vadd.f32 %v803, 1e-05
        %v836 = vadd.f32 %v804, 1e-05
        %v837 = vadd.f32 %v805, 1e-05
        %v838 = vadd.f32 %v806, 1e-05
        %v839 = vadd.f32 %v807, 1e-05
        %v840 = vadd.f32 %v808, 1e-05
        %v841 = vadd.f32 %v809, 1e-05
        %v842 = vrsqrt.pop %v810
        %v843 = vmul.f32 %v842, %v810
        %v844 = vmul.f32 %v843, %v842
        %v845 = vmul.f32 0.5, %v844
        %v846 = vsub.f32 1.5, %v845
        %v847 = vmul.f32 %v842, %v846
        %vm848 = vweird.f32 %v810
        %vm849 = vweird.f32 %v842
        %vm850 = vmor %vm848, %vm849
        %v851 = vsel %vm850, %v842, %v847
        %v852 = vrsqrt.pop %v811
        %v853 = vmul.f32 %v852, %v811
        %v854 = vmul.f32 %v853, %v852
        %v855 = vmul.f32 0.5, %v854
        %v856 = vsub.f32 1.5, %v855
        %v857 = vmul.f32 %v852, %v856
        %vm858 = vweird.f32 %v811
        %vm859 = vweird.f32 %v852
        %vm860 = vmor %vm858, %vm859
        %v861 = vsel %vm860, %v852, %v857
        %v862 = vrsqrt.pop %v812
        %v863 = vmul.f32 %v862, %v812
        %v864 = vmul.f32 %v863, %v862
        %v865 = vmul.f32 0.5, %v864
        %v866 = vsub.f32 1.5, %v865
        %v867 = vmul.f32 %v862, %v866
        %vm868 = vweird.f32 %v812
        %vm869 = vweird.f32 %v862
        %vm870 = vmor %vm868, %vm869
        %v871 = vsel %vm870, %v862, %v867
        %v872 = vrsqrt.pop %v813
        %v873 = vmul.f32 %v872, %v813
        %v874 = vmul.f32 %v873, %v872
        %v875 = vmul.f32 0.5, %v874
        %v876 = vsub.f32 1.5, %v875
        %v877 = vmul.f32 %v872, %v876
        %vm878 = vweird.f32 %v813
        %vm879 = vweird.f32 %v872
        %vm880 = vmor %vm878, %vm879
        %v881 = vsel %vm880, %v872, %v877
        %v882 = vrsqrt.pop %v814
        %v883 = vmul.f32 %v882, %v814
        %v884 = vmul.f32 %v883, %v882
        %v885 = vmul.f32 0.5, %v884
        %v886 = vsub.f32 1.5, %v885
        %v887 = vmul.f32 %v882, %v886
        %vm888 = vweird.f32 %v814
        %vm889 = vweird.f32 %v882
        %vm890 = vmor %vm888, %vm889
        %v891 = vsel %vm890, %v882, %v887
        %v892 = vrsqrt.pop %v815
        %v893 = vmul.f32 %v892, %v815
        %v894 = vmul.f32 %v893, %v892
        %v895 = vmul.f32 0.5, %v894
        %v896 = vsub.f32 1.5, %v895
        %v897 = vmul.f32 %v892, %v896
        %vm898 = vweird.f32 %v815
        %vm899 = vweird.f32 %v892
        %vm900 = vmor %vm898, %vm899
        %v901 = vsel %vm900, %v892, %v897
        %v902 = vrsqrt.pop %v816
        %v903 = vmul.f32 %v902, %v816
        %v904 = vmul.f32 %v903, %v902
        %v905 = vmul.f32 0.5, %v904
        %v906 = vsub.f32 1.5, %v905
        %v907 = vmul.f32 %v902, %v906
        %vm908 = vweird.f32 %v816
        %vm909 = vweird.f32 %v902
        %vm910 = vmor %vm908, %vm909
        %v911 = vsel %vm910, %v902, %v907
        %v912 = vrsqrt.pop %v817
        %v913 = vmul.f32 %v912, %v817
        %v914 = vmul.f32 %v913, %v912
        %v915 = vmul.f32 0.5, %v914
        %v916 = vsub.f32 1.5, %v915
        %v917 = vmul.f32 %v912, %v916
        %vm918 = vweird.f32 %v817
        %vm919 = vweird.f32 %v912
        %vm920 = vmor %vm918, %vm919
        %v921 = vsel %vm920, %v912, %v917
        %v922 = vrsqrt.pop %v818
        %v923 = vmul.f32 %v922, %v818
        %v924 = vmul.f32 %v923, %v922
        %v925 = vmul.f32 0.5, %v924
        %v926 = vsub.f32 1.5, %v925
        %v927 = vmul.f32 %v922, %v926
        %vm928 = vweird.f32 %v818
        %vm929 = vweird.f32 %v922
        %vm930 = vmor %vm928, %vm929
        %v931 = vsel %vm930, %v922, %v927
        %v932 = vrsqrt.pop %v819
        %v933 = vmul.f32 %v932, %v819
        %v934 = vmul.f32 %v933, %v932
        %v935 = vmul.f32 0.5, %v934
        %v936 = vsub.f32 1.5, %v935
        %v937 = vmul.f32 %v932, %v936
        %vm938 = vweird.f32 %v819
        %vm939 = vweird.f32 %v932
        %vm940 = vmor %vm938, %vm939
        %v941 = vsel %vm940, %v932, %v937
        %v942 = vrsqrt.pop %v820
        %v943 = vmul.f32 %v942, %v820
        %v944 = vmul.f32 %v943, %v942
        %v945 = vmul.f32 0.5, %v944
        %v946 = vsub.f32 1.5, %v945
        %v947 = vmul.f32 %v942, %v946
        %vm948 = vweird.f32 %v820
        %vm949 = vweird.f32 %v942
        %vm950 = vmor %vm948, %vm949
        %v951 = vsel %vm950, %v942, %v947
        %v952 = vrsqrt.pop %v821
        %v953 = vmul.f32 %v952, %v821
        %v954 = vmul.f32 %v953, %v952
        %v955 = vmul.f32 0.5, %v954
        %v956 = vsub.f32 1.5, %v955
        %v957 = vmul.f32 %v952, %v956
        %vm958 = vweird.f32 %v821
        %vm959 = vweird.f32 %v952
        %vm960 = vmor %vm958, %vm959
        %v961 = vsel %vm960, %v952, %v957
        %v962 = vrsqrt.pop %v822
        %v963 = vmul.f32 %v962, %v822
        %v964 = vmul.f32 %v963, %v962
        %v965 = vmul.f32 0.5, %v964
        %v966 = vsub.f32 1.5, %v965
        %v967 = vmul.f32 %v962, %v966
        %vm968 = vweird.f32 %v822
        %vm969 = vweird.f32 %v962
        %vm970 = vmor %vm968, %vm969
        %v971 = vsel %vm970, %v962, %v967
        %v972 = vrsqrt.pop %v823
        %v973 = vmul.f32 %v972, %v823
        %v974 = vmul.f32 %v973, %v972
        %v975 = vmul.f32 0.5, %v974
        %v976 = vsub.f32 1.5, %v975
        %v977 = vmul.f32 %v972, %v976
        %vm978 = vweird.f32 %v823
        %vm979 = vweird.f32 %v972
        %vm980 = vmor %vm978, %vm979
        %v981 = vsel %vm980, %v972, %v977
        %v982 = vrsqrt.pop %v824
        %v983 = vmul.f32 %v982, %v824
        %v984 = vmul.f32 %v983, %v982
        %v985 = vmul.f32 0.5, %v984
        %v986 = vsub.f32 1.5, %v985
        %v987 = vmul.f32 %v982, %v986
        %vm988 = vweird.f32 %v824
        %vm989 = vweird.f32 %v982
        %vm990 = vmor %vm988, %vm989
        %v991 = vsel %vm990, %v982, %v987
        %v992 = vrsqrt.pop %v825
        %v993 = vmul.f32 %v992, %v825
        %v994 = vmul.f32 %v993, %v992
        %v995 = vmul.f32 0.5, %v994
        %v996 = vsub.f32 1.5, %v995
        %v997 = vmul.f32 %v992, %v996
        %vm998 = vweird.f32 %v825
        %vm999 = vweird.f32 %v992
        %vm1000 = vmor %vm998, %vm999
        %v1001 = vsel %vm1000, %v992, %v997
        %v1002 = vrsqrt.pop %v826
        %v1003 = vmul.f32 %v1002, %v826
        %v1004 = vmul.f32 %v1003, %v1002
        %v1005 = vmul.f32 0.5, %v1004
        %v1006 = vsub.f32 1.5, %v1005
        %v1007 = vmul.f32 %v1002, %v1006
        %vm1008 = vweird.f32 %v826
        %vm1009 = vweird.f32 %v1002
        %vm1010 = vmor %vm1008, %vm1009
        %v1011 = vsel %vm1010, %v1002, %v1007
        %v1012 = vrsqrt.pop %v827
        %v1013 = vmul.f32 %v1012, %v827
        %v1014 = vmul.f32 %v1013, %v1012
        %v1015 = vmul.f32 0.5, %v1014
        %v1016 = vsub.f32 1.5, %v1015
        %v1017 = vmul.f32 %v1012, %v1016
        %vm1018 = vweird.f32 %v827
        %vm1019 = vweird.f32 %v1012
        %vm1020 = vmor %vm1018, %vm1019
        %v1021 = vsel %vm1020, %v1012, %v1017
        %v1022 = vrsqrt.pop %v828
        %v1023 = vmul.f32 %v1022, %v828
        %v1024 = vmul.f32 %v1023, %v1022
        %v1025 = vmul.f32 0.5, %v1024
        %v1026 = vsub.f32 1.5, %v1025
        %v1027 = vmul.f32 %v1022, %v1026
        %vm1028 = vweird.f32 %v828
        %vm1029 = vweird.f32 %v1022
        %vm1030 = vmor %vm1028, %vm1029
        %v1031 = vsel %vm1030, %v1022, %v1027
        %v1032 = vrsqrt.pop %v829
        %v1033 = vmul.f32 %v1032, %v829
        %v1034 = vmul.f32 %v1033, %v1032
        %v1035 = vmul.f32 0.5, %v1034
        %v1036 = vsub.f32 1.5, %v1035
        %v1037 = vmul.f32 %v1032, %v1036
        %vm1038 = vweird.f32 %v829
        %vm1039 = vweird.f32 %v1032
        %vm1040 = vmor %vm1038, %vm1039
        %v1041 = vsel %vm1040, %v1032, %v1037
        %v1042 = vrsqrt.pop %v830
        %v1043 = vmul.f32 %v1042, %v830
        %v1044 = vmul.f32 %v1043, %v1042
        %v1045 = vmul.f32 0.5, %v1044
        %v1046 = vsub.f32 1.5, %v1045
        %v1047 = vmul.f32 %v1042, %v1046
        %vm1048 = vweird.f32 %v830
        %vm1049 = vweird.f32 %v1042
        %vm1050 = vmor %vm1048, %vm1049
        %v1051 = vsel %vm1050, %v1042, %v1047
        %v1052 = vrsqrt.pop %v831
        %v1053 = vmul.f32 %v1052, %v831
        %v1054 = vmul.f32 %v1053, %v1052
        %v1055 = vmul.f32 0.5, %v1054
        %v1056 = vsub.f32 1.5, %v1055
        %v1057 = vmul.f32 %v1052, %v1056
        %vm1058 = vweird.f32 %v831
        %vm1059 = vweird.f32 %v1052
        %vm1060 = vmor %vm1058, %vm1059
        %v1061 = vsel %vm1060, %v1052, %v1057
        %v1062 = vrsqrt.pop %v832
        %v1063 = vmul.f32 %v1062, %v832
        %v1064 = vmul.f32 %v1063, %v1062
        %v1065 = vmul.f32 0.5, %v1064
        %v1066 = vsub.f32 1.5, %v1065
        %v1067 = vmul.f32 %v1062, %v1066
        %vm1068 = vweird.f32 %v832
        %vm1069 = vweird.f32 %v1062
        %vm1070 = vmor %vm1068, %vm1069
        %v1071 = vsel %vm1070, %v1062, %v1067
        %v1072 = vrsqrt.pop %v833
        %v1073 = vmul.f32 %v1072, %v833
        %v1074 = vmul.f32 %v1073, %v1072
        %v1075 = vmul.f32 0.5, %v1074
        %v1076 = vsub.f32 1.5, %v1075
        %v1077 = vmul.f32 %v1072, %v1076
        %vm1078 = vweird.f32 %v833
        %vm1079 = vweird.f32 %v1072
        %vm1080 = vmor %vm1078, %vm1079
        %v1081 = vsel %vm1080, %v1072, %v1077
        %v1082 = vrsqrt.pop %v834
        %v1083 = vmul.f32 %v1082, %v834
        %v1084 = vmul.f32 %v1083, %v1082
        %v1085 = vmul.f32 0.5, %v1084
        %v1086 = vsub.f32 1.5, %v1085
        %v1087 = vmul.f32 %v1082, %v1086
        %vm1088 = vweird.f32 %v834
        %vm1089 = vweird.f32 %v1082
        %vm1090 = vmor %vm1088, %vm1089
        %v1091 = vsel %vm1090, %v1082, %v1087
        %v1092 = vrsqrt.pop %v835
        %v1093 = vmul.f32 %v1092, %v835
        %v1094 = vmul.f32 %v1093, %v1092
        %v1095 = vmul.f32 0.5, %v1094
        %v1096 = vsub.f32 1.5, %v1095
        %v1097 = vmul.f32 %v1092, %v1096
        %vm1098 = vweird.f32 %v835
        %vm1099 = vweird.f32 %v1092
        %vm1100 = vmor %vm1098, %vm1099
        %v1101 = vsel %vm1100, %v1092, %v1097
        %v1102 = vrsqrt.pop %v836
        %v1103 = vmul.f32 %v1102, %v836
        %v1104 = vmul.f32 %v1103, %v1102
        %v1105 = vmul.f32 0.5, %v1104
        %v1106 = vsub.f32 1.5, %v1105
        %v1107 = vmul.f32 %v1102, %v1106
        %vm1108 = vweird.f32 %v836
        %vm1109 = vweird.f32 %v1102
        %vm1110 = vmor %vm1108, %vm1109
        %v1111 = vsel %vm1110, %v1102, %v1107
        %v1112 = vrsqrt.pop %v837
        %v1113 = vmul.f32 %v1112, %v837
        %v1114 = vmul.f32 %v1113, %v1112
        %v1115 = vmul.f32 0.5, %v1114
        %v1116 = vsub.f32 1.5, %v1115
        %v1117 = vmul.f32 %v1112, %v1116
        %vm1118 = vweird.f32 %v837
        %vm1119 = vweird.f32 %v1112
        %vm1120 = vmor %vm1118, %vm1119
        %v1121 = vsel %vm1120, %v1112, %v1117
        %v1122 = vrsqrt.pop %v838
        %v1123 = vmul.f32 %v1122, %v838
        %v1124 = vmul.f32 %v1123, %v1122
        %v1125 = vmul.f32 0.5, %v1124
        %v1126 = vsub.f32 1.5, %v1125
        %v1127 = vmul.f32 %v1122, %v1126
        %vm1128 = vweird.f32 %v838
        %vm1129 = vweird.f32 %v1122
        %vm1130 = vmor %vm1128, %vm1129
        %v1131 = vsel %vm1130, %v1122, %v1127
        %v1132 = vrsqrt.pop %v839
        %v1133 = vmul.f32 %v1132, %v839
        %v1134 = vmul.f32 %v1133, %v1132
        %v1135 = vmul.f32 0.5, %v1134
        %v1136 = vsub.f32 1.5, %v1135
        %v1137 = vmul.f32 %v1132, %v1136
        %vm1138 = vweird.f32 %v839
        %vm1139 = vweird.f32 %v1132
        %vm1140 = vmor %vm1138, %vm1139
        %v1141 = vsel %vm1140, %v1132, %v1137
        %v1142 = vrsqrt.pop %v840
        %v1143 = vmul.f32 %v1142, %v840
        %v1144 = vmul.f32 %v1143, %v1142
        %v1145 = vmul.f32 0.5, %v1144
        %v1146 = vsub.f32 1.5, %v1145
        %v1147 = vmul.f32 %v1142, %v1146
        %vm1148 = vweird.f32 %v840
        %vm1149 = vweird.f32 %v1142
        %vm1150 = vmor %vm1148, %vm1149
        %v1151 = vsel %vm1150, %v1142, %v1147
        %v1152 = vrsqrt.pop %v841
        %v1153 = vmul.f32 %v1152, %v841
        %v1154 = vmul.f32 %v1153, %v1152
        %v1155 = vmul.f32 0.5, %v1154
        %v1156 = vsub.f32 1.5, %v1155
        %v1157 = vmul.f32 %v1152, %v1156
        %vm1158 = vweird.f32 %v841
        %vm1159 = vweird.f32 %v1152
        %vm1160 = vmor %vm1158, %vm1159
        %v1161 = vsel %vm1160, %v1152, %v1157
        %v1162 = vmul.f32 %v554, %v851
        %v1163 = vmul.f32 %v555, %v851
        %v1164 = vmul.f32 %v556, %v861
        %v1165 = vmul.f32 %v557, %v861
        %v1166 = vmul.f32 %v558, %v871
        %v1167 = vmul.f32 %v559, %v871
        %v1168 = vmul.f32 %v560, %v881
        %v1169 = vmul.f32 %v561, %v881
        %v1170 = vmul.f32 %v562, %v891
        %v1171 = vmul.f32 %v563, %v891
        %v1172 = vmul.f32 %v564, %v901
        %v1173 = vmul.f32 %v565, %v901
        %v1174 = vmul.f32 %v566, %v911
        %v1175 = vmul.f32 %v567, %v911
        %v1176 = vmul.f32 %v568, %v921
        %v1177 = vmul.f32 %v569, %v921
        %v1178 = vmul.f32 %v570, %v931
        %v1179 = vmul.f32 %v571, %v931
        %v1180 = vmul.f32 %v572, %v941
        %v1181 = vmul.f32 %v573, %v941
        %v1182 = vmul.f32 %v574, %v951
        %v1183 = vmul.f32 %v575, %v951
        %v1184 = vmul.f32 %v576, %v961
        %v1185 = vmul.f32 %v577, %v961
        %v1186 = vmul.f32 %v578, %v971
        %v1187 = vmul.f32 %v579, %v971
        %v1188 = vmul.f32 %v580, %v981
        %v1189 = vmul.f32 %v581, %v981
        %v1190 = vmul.f32 %v582, %v991
        %v1191 = vmul.f32 %v583, %v991
        %v1192 = vmul.f32 %v584, %v1001
        %v1193 = vmul.f32 %v585, %v1001
        %v1194 = vmul.f32 %v586, %v1011
        %v1195 = vmul.f32 %v587, %v1011
        %v1196 = vmul.f32 %v588, %v1021
        %v1197 = vmul.f32 %v589, %v1021
        %v1198 = vmul.f32 %v590, %v1031
        %v1199 = vmul.f32 %v591, %v1031
        %v1200 = vmul.f32 %v592, %v1041
        %v1201 = vmul.f32 %v593, %v1041
        %v1202 = vmul.f32 %v594, %v1051
        %v1203 = vmul.f32 %v595, %v1051
        %v1204 = vmul.f32 %v596, %v1061
        %v1205 = vmul.f32 %v597, %v1061
        %v1206 = vmul.f32 %v598, %v1071
        %v1207 = vmul.f32 %v599, %v1071
        %v1208 = vmul.f32 %v600, %v1081
        %v1209 = vmul.f32 %v601, %v1081
        %v1210 = vmul.f32 %v602, %v1091
        %v1211 = vmul.f32 %v603, %v1091
        %v1212 = vmul.f32 %v604, %v1101
        %v1213 = vmul.f32 %v605, %v1101
        %v1214 = vmul.f32 %v606, %v1111
        %v1215 = vmul.f32 %v607, %v1111
        %v1216 = vmul.f32 %v608, %v1121
        %v1217 = vmul.f32 %v609, %v1121
        %v1218 = vmul.f32 %v610, %v1131
        %v1219 = vmul.f32 %v611, %v1131
        %v1220 = vmul.f32 %v612, %v1141
        %v1221 = vmul.f32 %v613, %v1141
        %v1222 = vmul.f32 %v614, %v1151
        %v1223 = vmul.f32 %v615, %v1151
        %v1224 = vmul.f32 %v616, %v1161
        %v1225 = vmul.f32 %v617, %v1161
        %v1226 = vld [vmem:[#allocation5] sm:$0x3]
        %v1228 = vperm.slane %v1226, 0
        %v1229 = vperm.slane %v1226, 1
        %v1232 = vmul.f32 %v1162, %v1228
        %v1233 = vmul.f32 %v1163, %v1229
        %v1234 = vmul.f32 %v1164, %v1228
        %v1235 = vmul.f32 %v1165, %v1229
        %v1236 = vmul.f32 %v1166, %v1228
        %v1237 = vmul.f32 %v1167, %v1229
        %v1238 = vmul.f32 %v1168, %v1228
        %v1239 = vmul.f32 %v1169, %v1229
        %v1240 = vmul.f32 %v1170, %v1228
        %v1241 = vmul.f32 %v1171, %v1229
        %v1242 = vmul.f32 %v1172, %v1228
        %v1243 = vmul.f32 %v1173, %v1229
        %v1244 = vmul.f32 %v1174, %v1228
        %v1245 = vmul.f32 %v1175, %v1229
        %v1246 = vmul.f32 %v1176, %v1228
        %v1247 = vmul.f32 %v1177, %v1229
        %v1248 = vmul.f32 %v1178, %v1228
        %v1249 = vmul.f32 %v1179, %v1229
        %v1250 = vmul.f32 %v1180, %v1228
        %v1251 = vmul.f32 %v1181, %v1229
        %v1252 = vmul.f32 %v1182, %v1228
        %v1253 = vmul.f32 %v1183, %v1229
        %v1254 = vmul.f32 %v1184, %v1228
        %v1255 = vmul.f32 %v1185, %v1229
        %v1256 = vmul.f32 %v1186, %v1228
        %v1257 = vmul.f32 %v1187, %v1229
        %v1258 = vmul.f32 %v1188, %v1228
        %v1259 = vmul.f32 %v1189, %v1229
        %v1260 = vmul.f32 %v1190, %v1228
        %v1261 = vmul.f32 %v1191, %v1229
        %v1262 = vmul.f32 %v1192, %v1228
        %v1263 = vmul.f32 %v1193, %v1229
        %v1264 = vmul.f32 %v1194, %v1228
        %v1265 = vmul.f32 %v1195, %v1229
        %v1266 = vmul.f32 %v1196, %v1228
        %v1267 = vmul.f32 %v1197, %v1229
        %v1268 = vmul.f32 %v1198, %v1228
        %v1269 = vmul.f32 %v1199, %v1229
        %v1270 = vmul.f32 %v1200, %v1228
        %v1271 = vmul.f32 %v1201, %v1229
        %v1272 = vmul.f32 %v1202, %v1228
        %v1273 = vmul.f32 %v1203, %v1229
        %v1274 = vmul.f32 %v1204, %v1228
        %v1275 = vmul.f32 %v1205, %v1229
        %v1276 = vmul.f32 %v1206, %v1228
        %v1277 = vmul.f32 %v1207, %v1229
        %v1278 = vmul.f32 %v1208, %v1228
        %v1279 = vmul.f32 %v1209, %v1229
        %v1280 = vmul.f32 %v1210, %v1228
        %v1281 = vmul.f32 %v1211, %v1229
        %v1282 = vmul.f32 %v1212, %v1228
        %v1283 = vmul.f32 %v1213, %v1229
        %v1284 = vmul.f32 %v1214, %v1228
        %v1285 = vmul.f32 %v1215, %v1229
        %v1286 = vmul.f32 %v1216, %v1228
        %v1287 = vmul.f32 %v1217, %v1229
        %v1288 = vmul.f32 %v1218, %v1228
        %v1289 = vmul.f32 %v1219, %v1229
        %v1290 = vmul.f32 %v1220, %v1228
        %v1291 = vmul.f32 %v1221, %v1229
        %v1292 = vmul.f32 %v1222, %v1228
        %v1293 = vmul.f32 %v1223, %v1229
        %v1294 = vmul.f32 %v1224, %v1228
        %v1295 = vmul.f32 %v1225, %v1229
        %v1296 = vld [vmem:[#allocation7] sm:$0x3]
        %v1298 = vperm.slane %v1296, 0
        %v1299 = vperm.slane %v1296, 1
        %v1302 = vadd.f32 %v1232, %v1298
        %v1303 = vadd.f32 %v1233, %v1299
        %v1304 = vadd.f32 %v1234, %v1298
        %v1305 = vadd.f32 %v1235, %v1299
        %v1306 = vadd.f32 %v1236, %v1298
        %v1307 = vadd.f32 %v1237, %v1299
        %v1308 = vadd.f32 %v1238, %v1298
        %v1309 = vadd.f32 %v1239, %v1299
        %v1310 = vadd.f32 %v1240, %v1298
        %v1311 = vadd.f32 %v1241, %v1299
        %v1312 = vadd.f32 %v1242, %v1298
        %v1313 = vadd.f32 %v1243, %v1299
        %v1314 = vadd.f32 %v1244, %v1298
        %v1315 = vadd.f32 %v1245, %v1299
        %v1316 = vadd.f32 %v1246, %v1298
        %v1317 = vadd.f32 %v1247, %v1299
        %v1318 = vadd.f32 %v1248, %v1298
        %v1319 = vadd.f32 %v1249, %v1299
        %v1320 = vadd.f32 %v1250, %v1298
        %v1321 = vadd.f32 %v1251, %v1299
        %v1322 = vadd.f32 %v1252, %v1298
        %v1323 = vadd.f32 %v1253, %v1299
        %v1324 = vadd.f32 %v1254, %v1298
        %v1325 = vadd.f32 %v1255, %v1299
        %v1326 = vadd.f32 %v1256, %v1298
        %v1327 = vadd.f32 %v1257, %v1299
        %v1328 = vadd.f32 %v1258, %v1298
        %v1329 = vadd.f32 %v1259, %v1299
        %v1330 = vadd.f32 %v1260, %v1298
        %v1331 = vadd.f32 %v1261, %v1299
        %v1332 = vadd.f32 %v1262, %v1298
        %v1333 = vadd.f32 %v1263, %v1299
        %v1334 = vadd.f32 %v1264, %v1298
        %v1335 = vadd.f32 %v1265, %v1299
        %v1336 = vadd.f32 %v1266, %v1298
        %v1337 = vadd.f32 %v1267, %v1299
        %v1338 = vadd.f32 %v1268, %v1298
        %v1339 = vadd.f32 %v1269, %v1299
        %v1340 = vadd.f32 %v1270, %v1298
        %v1341 = vadd.f32 %v1271, %v1299
        %v1342 = vadd.f32 %v1272, %v1298
        %v1343 = vadd.f32 %v1273, %v1299
        %v1344 = vadd.f32 %v1274, %v1298
        %v1345 = vadd.f32 %v1275, %v1299
        %v1346 = vadd.f32 %v1276, %v1298
        %v1347 = vadd.f32 %v1277, %v1299
        %v1348 = vadd.f32 %v1278, %v1298
        %v1349 = vadd.f32 %v1279, %v1299
        %v1350 = vadd.f32 %v1280, %v1298
        %v1351 = vadd.f32 %v1281, %v1299
        %v1352 = vadd.f32 %v1282, %v1298
        %v1353 = vadd.f32 %v1283, %v1299
        %v1354 = vadd.f32 %v1284, %v1298
        %v1355 = vadd.f32 %v1285, %v1299
        %v1356 = vadd.f32 %v1286, %v1298
        %v1357 = vadd.f32 %v1287, %v1299
        %v1358 = vadd.f32 %v1288, %v1298
        %v1359 = vadd.f32 %v1289, %v1299
        %v1360 = vadd.f32 %v1290, %v1298
        %v1361 = vadd.f32 %v1291, %v1299
        %v1362 = vadd.f32 %v1292, %v1298
        %v1363 = vadd.f32 %v1293, %v1299
        %v1364 = vadd.f32 %v1294, %v1298
        %v1365 = vadd.f32 %v1295, %v1299
        %v1366 = vpack.c.bf16 %v1304, %v1302
        %v1367 = vpack.c.bf16 %v1305, %v1303
        %v1368 = vpack.c.bf16 %v1308, %v1306
        %v1369 = vpack.c.bf16 %v1309, %v1307
        %v1370 = vpack.c.bf16 %v1312, %v1310
        %v1371 = vpack.c.bf16 %v1313, %v1311
        %v1372 = vpack.c.bf16 %v1316, %v1314
        %v1373 = vpack.c.bf16 %v1317, %v1315
        %v1374 = vpack.c.bf16 %v1320, %v1318
        %v1375 = vpack.c.bf16 %v1321, %v1319
        %v1376 = vpack.c.bf16 %v1324, %v1322
        %v1377 = vpack.c.bf16 %v1325, %v1323
        %v1378 = vpack.c.bf16 %v1328, %v1326
        %v1379 = vpack.c.bf16 %v1329, %v1327
        %v1380 = vpack.c.bf16 %v1332, %v1330
        %v1381 = vpack.c.bf16 %v1333, %v1331
        %v1382 = vpack.c.bf16 %v1336, %v1334
        %v1383 = vpack.c.bf16 %v1337, %v1335
        %v1384 = vpack.c.bf16 %v1340, %v1338
        %v1385 = vpack.c.bf16 %v1341, %v1339
        %v1386 = vpack.c.bf16 %v1344, %v1342
        %v1387 = vpack.c.bf16 %v1345, %v1343
        %v1388 = vpack.c.bf16 %v1348, %v1346
        %v1389 = vpack.c.bf16 %v1349, %v1347
        %v1390 = vpack.c.bf16 %v1352, %v1350
        %v1391 = vpack.c.bf16 %v1353, %v1351
        %v1392 = vpack.c.bf16 %v1356, %v1354
        %v1393 = vpack.c.bf16 %v1357, %v1355
        %v1394 = vpack.c.bf16 %v1360, %v1358
        %v1395 = vpack.c.bf16 %v1361, %v1359
        %v1396 = vpack.c.bf16 %v1364, %v1362
        %v1397 = vpack.c.bf16 %v1365, %v1363
        %v1398 = vld [vmem:[%s307] sm:$0xff]
        %v1399 = vld [vmem:[%s307 + $0x8] sm:$0xff]
        %v1400 = vld [vmem:[%s307 + $0x10] sm:$0xff]
        %v1401 = vld [vmem:[%s307 + $0x18] sm:$0xff]
        %v1402 = vld [vmem:[%s307 + $0x20] sm:$0xff]
        %v1403 = vld [vmem:[%s307 + $0x28] sm:$0xff]
        %v1404 = vld [vmem:[%s307 + $0x30] sm:$0xff]
        %v1405 = vld [vmem:[%s307 + $0x38] sm:$0xff]
        %v1406 = vld [vmem:[%s307 + $0x40] sm:$0xff]
        %v1407 = vld [vmem:[%s307 + $0x48] sm:$0xff]
        %v1408 = vld [vmem:[%s307 + $0x50] sm:$0xff]
        %v1409 = vld [vmem:[%s307 + $0x58] sm:$0xff]
        %v1410 = vld [vmem:[%s307 + $0x60] sm:$0xff]
        %v1411 = vld [vmem:[%s307 + $0x68] sm:$0xff]
        %v1412 = vld [vmem:[%s307 + $0x70] sm:$0xff]
        %v1413 = vld [vmem:[%s307 + $0x78] sm:$0xff]
        %v1414 = vld [vmem:[%s307 + $0x80] sm:$0xff]
        %v1415 = vld [vmem:[%s307 + $0x88] sm:$0xff]
        %v1416 = vld [vmem:[%s307 + $0x90] sm:$0xff]
        %v1417 = vld [vmem:[%s307 + $0x98] sm:$0xff]
        %v1418 = vld [vmem:[%s307 + $0xa0] sm:$0xff]
        %v1419 = vld [vmem:[%s307 + $0xa8] sm:$0xff]
        %v1420 = vld [vmem:[%s307 + $0xb0] sm:$0xff]
        %v1421 = vld [vmem:[%s307 + $0xb8] sm:$0xff]
        %v1422 = vld [vmem:[%s307 + $0xc0] sm:$0xff]
        %v1423 = vld [vmem:[%s307 + $0xc8] sm:$0xff]
        %v1424 = vld [vmem:[%s307 + $0xd0] sm:$0xff]
        %v1425 = vld [vmem:[%s307 + $0xd8] sm:$0xff]
        %v1426 = vld [vmem:[%s307 + $0xe0] sm:$0xff]
        %v1427 = vld [vmem:[%s307 + $0xe8] sm:$0xff]
        %v1428 = vld [vmem:[%s307 + $0xf0] sm:$0xff]
        %v1429 = vld [vmem:[%s307 + $0xf8] sm:$0xff]
        %v1430 = vld [vmem:[%s317] sm:$0x3]
        %v1432 = vperm.slane %v1430, 0
        %v1433 = vperm.slane %v1430, 1
        %v1468 = vunpack.c.l.b16 %v1398
        %v1469 = vunpack.c.h.b16 %v1398
        %v1470 = vunpack.c.l.b16 %v1399
        %v1471 = vunpack.c.h.b16 %v1399
        %v1472 = vunpack.c.l.b16 %v1400
        %v1473 = vunpack.c.h.b16 %v1400
        %v1474 = vunpack.c.l.b16 %v1401
        %v1475 = vunpack.c.h.b16 %v1401
        %v1476 = vunpack.c.l.b16 %v1402
        %v1477 = vunpack.c.h.b16 %v1402
        %v1478 = vunpack.c.l.b16 %v1403
        %v1479 = vunpack.c.h.b16 %v1403
        %v1480 = vunpack.c.l.b16 %v1404
        %v1481 = vunpack.c.h.b16 %v1404
        %v1482 = vunpack.c.l.b16 %v1405
        %v1483 = vunpack.c.h.b16 %v1405
        %v1484 = vunpack.c.l.b16 %v1406
        %v1485 = vunpack.c.h.b16 %v1406
        %v1486 = vunpack.c.l.b16 %v1407
        %v1487 = vunpack.c.h.b16 %v1407
        %v1488 = vunpack.c.l.b16 %v1408
        %v1489 = vunpack.c.h.b16 %v1408
        %v1490 = vunpack.c.l.b16 %v1409
        %v1491 = vunpack.c.h.b16 %v1409
        %v1492 = vunpack.c.l.b16 %v1410
        %v1493 = vunpack.c.h.b16 %v1410
        %v1494 = vunpack.c.l.b16 %v1411
        %v1495 = vunpack.c.h.b16 %v1411
        %v1496 = vunpack.c.l.b16 %v1412
        %v1497 = vunpack.c.h.b16 %v1412
        %v1498 = vunpack.c.l.b16 %v1413
        %v1499 = vunpack.c.h.b16 %v1413
        %v1500 = vunpack.c.l.b16 %v1414
        %v1501 = vunpack.c.h.b16 %v1414
        %v1502 = vunpack.c.l.b16 %v1415
        %v1503 = vunpack.c.h.b16 %v1415
        %v1504 = vunpack.c.l.b16 %v1416
        %v1505 = vunpack.c.h.b16 %v1416
        %v1506 = vunpack.c.l.b16 %v1417
        %v1507 = vunpack.c.h.b16 %v1417
        %v1508 = vunpack.c.l.b16 %v1418
        %v1509 = vunpack.c.h.b16 %v1418
        %v1510 = vunpack.c.l.b16 %v1419
        %v1511 = vunpack.c.h.b16 %v1419
        %v1512 = vunpack.c.l.b16 %v1420
        %v1513 = vunpack.c.h.b16 %v1420
        %v1514 = vunpack.c.l.b16 %v1421
        %v1515 = vunpack.c.h.b16 %v1421
        %v1516 = vunpack.c.l.b16 %v1422
        %v1517 = vunpack.c.h.b16 %v1422
        %v1518 = vunpack.c.l.b16 %v1423
        %v1519 = vunpack.c.h.b16 %v1423
        %v1520 = vunpack.c.l.b16 %v1424
        %v1521 = vunpack.c.h.b16 %v1424
        %v1522 = vunpack.c.l.b16 %v1425
        %v1523 = vunpack.c.h.b16 %v1425
        %v1524 = vunpack.c.l.b16 %v1426
        %v1525 = vunpack.c.h.b16 %v1426
        %v1526 = vunpack.c.l.b16 %v1427
        %v1527 = vunpack.c.h.b16 %v1427
        %v1528 = vunpack.c.l.b16 %v1428
        %v1529 = vunpack.c.h.b16 %v1428
        %v1530 = vunpack.c.l.b16 %v1429
        %v1531 = vunpack.c.h.b16 %v1429
        %v1532 = vpack.c.b16 %v1470, %v1468
        %v1533 = vpack.c.b16 %v1471, %v1469
        %v1534 = vpack.c.b16 %v1474, %v1472
        %v1535 = vpack.c.b16 %v1475, %v1473
        %v1536 = vpack.c.b16 %v1478, %v1476
        %v1537 = vpack.c.b16 %v1479, %v1477
        %v1538 = vpack.c.b16 %v1482, %v1480
        %v1539 = vpack.c.b16 %v1483, %v1481
        %v1540 = vpack.c.b16 %v1486, %v1484
        %v1541 = vpack.c.b16 %v1487, %v1485
        %v1542 = vpack.c.b16 %v1490, %v1488
        %v1543 = vpack.c.b16 %v1491, %v1489
        %v1544 = vpack.c.b16 %v1494, %v1492
        %v1545 = vpack.c.b16 %v1495, %v1493
        %v1546 = vpack.c.b16 %v1498, %v1496
        %v1547 = vpack.c.b16 %v1499, %v1497
        %v1548 = vpack.c.b16 %v1502, %v1500
        %v1549 = vpack.c.b16 %v1503, %v1501
        %v1550 = vpack.c.b16 %v1506, %v1504
        %v1551 = vpack.c.b16 %v1507, %v1505
        %v1552 = vpack.c.b16 %v1510, %v1508
        %v1553 = vpack.c.b16 %v1511, %v1509
        %v1554 = vpack.c.b16 %v1514, %v1512
        %v1555 = vpack.c.b16 %v1515, %v1513
        %v1556 = vpack.c.b16 %v1518, %v1516
        %v1557 = vpack.c.b16 %v1519, %v1517
        %v1558 = vpack.c.b16 %v1522, %v1520
        %v1559 = vpack.c.b16 %v1523, %v1521
        %v1560 = vpack.c.b16 %v1526, %v1524
        %v1561 = vpack.c.b16 %v1527, %v1525
        %v1562 = vpack.c.b16 %v1530, %v1528
        %v1563 = vpack.c.b16 %v1531, %v1529
        %1596 = vmatpush.bf16.msra.mxu0 %v1546
        %1597 = vmatpush.bf16.msra.mxu0 %v1544
        %1598 = vmatpush.bf16.msra.mxu0 %v1542
        %1599 = vmatpush.bf16.msra.mxu0 %v1540
        %1600 = vmatpush.bf16.msra.mxu0 %v1538
        %1601 = vmatpush.bf16.msra.mxu0 %v1536
        %1602 = vmatpush.bf16.msra.mxu0 %v1534
        %1603 = vmatpush.bf16.msra.mxu0 %v1532
        %1604 = vmatmul.bf16.gmra.mxu0 %v1366
        %v1605 = vpop.f32.mrf.mxu0
        %v1606 = vadd.f32 %v1432, %v1605
        %v1607 = vpop.f32.mrf.mxu0
        %v1608 = vadd.f32 %v1432, %v1607
        %1609 = vmatmul.bf16.gmra.mxu0 %v1368
        %v1610 = vpop.f32.mrf.mxu0
        %v1611 = vadd.f32 %v1432, %v1610
        %v1612 = vpop.f32.mrf.mxu0
        %v1613 = vadd.f32 %v1432, %v1612
        %1614 = vmatmul.bf16.gmra.mxu0 %v1370
        %v1615 = vpop.f32.mrf.mxu0
        %v1616 = vadd.f32 %v1432, %v1615
        %v1617 = vpop.f32.mrf.mxu0
        %v1618 = vadd.f32 %v1432, %v1617
        %1619 = vmatmul.bf16.gmra.mxu0 %v1372
        %v1620 = vpop.f32.mrf.mxu0
        %v1621 = vadd.f32 %v1432, %v1620
        %v1622 = vpop.f32.mrf.mxu0
        %v1623 = vadd.f32 %v1432, %v1622
        %1624 = vmatmul.bf16.gmra.mxu0 %v1374
        %v1625 = vpop.f32.mrf.mxu0
        %v1626 = vadd.f32 %v1432, %v1625
        %v1627 = vpop.f32.mrf.mxu0
        %v1628 = vadd.f32 %v1432, %v1627
        %1629 = vmatmul.bf16.gmra.mxu0 %v1376
        %v1630 = vpop.f32.mrf.mxu0
        %v1631 = vadd.f32 %v1432, %v1630
        %v1632 = vpop.f32.mrf.mxu0
        %v1633 = vadd.f32 %v1432, %v1632
        %1634 = vmatmul.bf16.gmra.mxu0 %v1378
        %v1635 = vpop.f32.mrf.mxu0
        %v1636 = vadd.f32 %v1432, %v1635
        %v1637 = vpop.f32.mrf.mxu0
        %v1638 = vadd.f32 %v1432, %v1637
        %1639 = vmatmul.bf16.gmra.mxu0 %v1380
        %v1640 = vpop.f32.mrf.mxu0
        %v1641 = vadd.f32 %v1432, %v1640
        %v1642 = vpop.f32.mrf.mxu0
        %v1643 = vadd.f32 %v1432, %v1642
        %1644 = vmatmul.bf16.gmra.mxu0 %v1382
        %v1645 = vpop.f32.mrf.mxu0
        %v1646 = vadd.f32 %v1432, %v1645
        %v1647 = vpop.f32.mrf.mxu0
        %v1648 = vadd.f32 %v1432, %v1647
        %1649 = vmatmul.bf16.gmra.mxu0 %v1384
        %v1650 = vpop.f32.mrf.mxu0
        %v1651 = vadd.f32 %v1432, %v1650
        %v1652 = vpop.f32.mrf.mxu0
        %v1653 = vadd.f32 %v1432, %v1652
        %1654 = vmatmul.bf16.gmra.mxu0 %v1386
        %v1655 = vpop.f32.mrf.mxu0
        %v1656 = vadd.f32 %v1432, %v1655
        %v1657 = vpop.f32.mrf.mxu0
        %v1658 = vadd.f32 %v1432, %v1657
        %1659 = vmatmul.bf16.gmra.mxu0 %v1388
        %v1660 = vpop.f32.mrf.mxu0
        %v1661 = vadd.f32 %v1432, %v1660
        %v1662 = vpop.f32.mrf.mxu0
        %v1663 = vadd.f32 %v1432, %v1662
        %1664 = vmatmul.bf16.gmra.mxu0 %v1390
        %v1665 = vpop.f32.mrf.mxu0
        %v1666 = vadd.f32 %v1432, %v1665
        %v1667 = vpop.f32.mrf.mxu0
        %v1668 = vadd.f32 %v1432, %v1667
        %1669 = vmatmul.bf16.gmra.mxu0 %v1392
        %v1670 = vpop.f32.mrf.mxu0
        %v1671 = vadd.f32 %v1432, %v1670
        %v1672 = vpop.f32.mrf.mxu0
        %v1673 = vadd.f32 %v1432, %v1672
        %1674 = vmatmul.bf16.gmra.mxu0 %v1394
        %v1675 = vpop.f32.mrf.mxu0
        %v1676 = vadd.f32 %v1432, %v1675
        %v1677 = vpop.f32.mrf.mxu0
        %v1678 = vadd.f32 %v1432, %v1677
        %1679 = vmatmul.bf16.gmra.mxu0 %v1396
        %v1680 = vpop.f32.mrf.mxu0
        %v1681 = vadd.f32 %v1432, %v1680
        %v1682 = vpop.f32.mrf.mxu0
        %v1683 = vadd.f32 %v1432, %v1682
        %1684 = vdwg.mxu0
        %1685 = vmatpush.bf16.msra.mxu0 %v1562
        %1686 = vmatpush.bf16.msra.mxu0 %v1560
        %1687 = vmatpush.bf16.msra.mxu0 %v1558
        %1688 = vmatpush.bf16.msra.mxu0 %v1556
        %1689 = vmatpush.bf16.msra.mxu0 %v1554
        %1690 = vmatpush.bf16.msra.mxu0 %v1552
        %1691 = vmatpush.bf16.msra.mxu0 %v1550
        %1692 = vmatpush.bf16.msra.mxu0 %v1548
        %1693 = vmatmul.bf16.gmra.mxu0 %v1367
        %v1694 = vpop.f32.mrf.mxu0
        %v1695 = vadd.f32 %v1606, %v1694
        %v1696 = vpop.f32.mrf.mxu0
        %v1697 = vadd.f32 %v1608, %v1696
        %1698 = vmatmul.bf16.gmra.mxu0 %v1369
        %v1699 = vpop.f32.mrf.mxu0
        %v1700 = vadd.f32 %v1611, %v1699
        %v1701 = vpop.f32.mrf.mxu0
        %v1702 = vadd.f32 %v1613, %v1701
        %1703 = vmatmul.bf16.gmra.mxu0 %v1371
        %v1704 = vpop.f32.mrf.mxu0
        %v1705 = vadd.f32 %v1616, %v1704
        %v1706 = vpop.f32.mrf.mxu0
        %v1707 = vadd.f32 %v1618, %v1706
        %1708 = vmatmul.bf16.gmra.mxu0 %v1373
        %v1709 = vpop.f32.mrf.mxu0
        %v1710 = vadd.f32 %v1621, %v1709
        %v1711 = vpop.f32.mrf.mxu0
        %v1712 = vadd.f32 %v1623, %v1711
        %1713 = vmatmul.bf16.gmra.mxu0 %v1375
        %v1714 = vpop.f32.mrf.mxu0
        %v1715 = vadd.f32 %v1626, %v1714
        %v1716 = vpop.f32.mrf.mxu0
        %v1717 = vadd.f32 %v1628, %v1716
        %1718 = vmatmul.bf16.gmra.mxu0 %v1377
        %v1719 = vpop.f32.mrf.mxu0
        %v1720 = vadd.f32 %v1631, %v1719
        %v1721 = vpop.f32.mrf.mxu0
        %v1722 = vadd.f32 %v1633, %v1721
        %1723 = vmatmul.bf16.gmra.mxu0 %v1379
        %v1724 = vpop.f32.mrf.mxu0
        %v1725 = vadd.f32 %v1636, %v1724
        %v1726 = vpop.f32.mrf.mxu0
        %v1727 = vadd.f32 %v1638, %v1726
        %1728 = vmatmul.bf16.gmra.mxu0 %v1381
        %v1729 = vpop.f32.mrf.mxu0
        %v1730 = vadd.f32 %v1641, %v1729
        %v1731 = vpop.f32.mrf.mxu0
        %v1732 = vadd.f32 %v1643, %v1731
        %1733 = vmatmul.bf16.gmra.mxu0 %v1383
        %v1734 = vpop.f32.mrf.mxu0
        %v1735 = vadd.f32 %v1646, %v1734
        %v1736 = vpop.f32.mrf.mxu0
        %v1737 = vadd.f32 %v1648, %v1736
        %1738 = vmatmul.bf16.gmra.mxu0 %v1385
        %v1739 = vpop.f32.mrf.mxu0
        %v1740 = vadd.f32 %v1651, %v1739
        %v1741 = vpop.f32.mrf.mxu0
        %v1742 = vadd.f32 %v1653, %v1741
        %1743 = vmatmul.bf16.gmra.mxu0 %v1387
        %v1744 = vpop.f32.mrf.mxu0
        %v1745 = vadd.f32 %v1656, %v1744
        %v1746 = vpop.f32.mrf.mxu0
        %v1747 = vadd.f32 %v1658, %v1746
        %1748 = vmatmul.bf16.gmra.mxu0 %v1389
        %v1749 = vpop.f32.mrf.mxu0
        %v1750 = vadd.f32 %v1661, %v1749
        %v1751 = vpop.f32.mrf.mxu0
        %v1752 = vadd.f32 %v1663, %v1751
        %1753 = vmatmul.bf16.gmra.mxu0 %v1391
        %v1754 = vpop.f32.mrf.mxu0
        %v1755 = vadd.f32 %v1666, %v1754
        %v1756 = vpop.f32.mrf.mxu0
        %v1757 = vadd.f32 %v1668, %v1756
        %1758 = vmatmul.bf16.gmra.mxu0 %v1393
        %v1759 = vpop.f32.mrf.mxu0
        %v1760 = vadd.f32 %v1671, %v1759
        %v1761 = vpop.f32.mrf.mxu0
        %v1762 = vadd.f32 %v1673, %v1761
        %1763 = vmatmul.bf16.gmra.mxu0 %v1395
        %v1764 = vpop.f32.mrf.mxu0
        %v1765 = vadd.f32 %v1676, %v1764
        %v1766 = vpop.f32.mrf.mxu0
        %v1767 = vadd.f32 %v1678, %v1766
        %1768 = vmatmul.bf16.gmra.mxu0 %v1397
        %v1769 = vpop.f32.mrf.mxu0
        %v1770 = vadd.f32 %v1681, %v1769
        %v1771 = vpop.f32.mrf.mxu0
        %v1772 = vadd.f32 %v1683, %v1771
        %1773 = vdwg.mxu0
        %1774 = vmatpush.bf16.msra.mxu0 %v1547
        %1775 = vmatpush.bf16.msra.mxu0 %v1545
        %1776 = vmatpush.bf16.msra.mxu0 %v1543
        %1777 = vmatpush.bf16.msra.mxu0 %v1541
        %1778 = vmatpush.bf16.msra.mxu0 %v1539
        %1779 = vmatpush.bf16.msra.mxu0 %v1537
        %1780 = vmatpush.bf16.msra.mxu0 %v1535
        %1781 = vmatpush.bf16.msra.mxu0 %v1533
        %1782 = vmatmul.bf16.gmra.mxu0 %v1366
        %v1783 = vpop.f32.mrf.mxu0
        %v1784 = vadd.f32 %v1433, %v1783
        %v1785 = vpop.f32.mrf.mxu0
        %v1786 = vadd.f32 %v1433, %v1785
        %1787 = vmatmul.bf16.gmra.mxu0 %v1368
        %v1788 = vpop.f32.mrf.mxu0
        %v1789 = vadd.f32 %v1433, %v1788
        %v1790 = vpop.f32.mrf.mxu0
        %v1791 = vadd.f32 %v1433, %v1790
        %1792 = vmatmul.bf16.gmra.mxu0 %v1370
        %v1793 = vpop.f32.mrf.mxu0
        %v1794 = vadd.f32 %v1433, %v1793
        %v1795 = vpop.f32.mrf.mxu0
        %v1796 = vadd.f32 %v1433, %v1795
        %1797 = vmatmul.bf16.gmra.mxu0 %v1372
        %v1798 = vpop.f32.mrf.mxu0
        %v1799 = vadd.f32 %v1433, %v1798
        %v1800 = vpop.f32.mrf.mxu0
        %v1801 = vadd.f32 %v1433, %v1800
        %1802 = vmatmul.bf16.gmra.mxu0 %v1374
        %v1803 = vpop.f32.mrf.mxu0
        %v1804 = vadd.f32 %v1433, %v1803
        %v1805 = vpop.f32.mrf.mxu0
        %v1806 = vadd.f32 %v1433, %v1805
        %1807 = vmatmul.bf16.gmra.mxu0 %v1376
        %v1808 = vpop.f32.mrf.mxu0
        %v1809 = vadd.f32 %v1433, %v1808
        %v1810 = vpop.f32.mrf.mxu0
        %v1811 = vadd.f32 %v1433, %v1810
        %1812 = vmatmul.bf16.gmra.mxu0 %v1378
        %v1813 = vpop.f32.mrf.mxu0
        %v1814 = vadd.f32 %v1433, %v1813
        %v1815 = vpop.f32.mrf.mxu0
        %v1816 = vadd.f32 %v1433, %v1815
        %1817 = vmatmul.bf16.gmra.mxu0 %v1380
        %v1818 = vpop.f32.mrf.mxu0
        %v1819 = vadd.f32 %v1433, %v1818
        %v1820 = vpop.f32.mrf.mxu0
        %v1821 = vadd.f32 %v1433, %v1820
        %1822 = vmatmul.bf16.gmra.mxu0 %v1382
        %v1823 = vpop.f32.mrf.mxu0
        %v1824 = vadd.f32 %v1433, %v1823
        %v1825 = vpop.f32.mrf.mxu0
        %v1826 = vadd.f32 %v1433, %v1825
        %1827 = vmatmul.bf16.gmra.mxu0 %v1384
        %v1828 = vpop.f32.mrf.mxu0
        %v1829 = vadd.f32 %v1433, %v1828
        %v1830 = vpop.f32.mrf.mxu0
        %v1831 = vadd.f32 %v1433, %v1830
        %1832 = vmatmul.bf16.gmra.mxu0 %v1386
        %v1833 = vpop.f32.mrf.mxu0
        %v1834 = vadd.f32 %v1433, %v1833
        %v1835 = vpop.f32.mrf.mxu0
        %v1836 = vadd.f32 %v1433, %v1835
        %1837 = vmatmul.bf16.gmra.mxu0 %v1388
        %v1838 = vpop.f32.mrf.mxu0
        %v1839 = vadd.f32 %v1433, %v1838
        %v1840 = vpop.f32.mrf.mxu0
        %v1841 = vadd.f32 %v1433, %v1840
        %1842 = vmatmul.bf16.gmra.mxu0 %v1390
        %v1843 = vpop.f32.mrf.mxu0
        %v1844 = vadd.f32 %v1433, %v1843
        %v1845 = vpop.f32.mrf.mxu0
        %v1846 = vadd.f32 %v1433, %v1845
        %1847 = vmatmul.bf16.gmra.mxu0 %v1392
        %v1848 = vpop.f32.mrf.mxu0
        %v1849 = vadd.f32 %v1433, %v1848
        %v1850 = vpop.f32.mrf.mxu0
        %v1851 = vadd.f32 %v1433, %v1850
        %1852 = vmatmul.bf16.gmra.mxu0 %v1394
        %v1853 = vpop.f32.mrf.mxu0
        %v1854 = vadd.f32 %v1433, %v1853
        %v1855 = vpop.f32.mrf.mxu0
        %v1856 = vadd.f32 %v1433, %v1855
        %1857 = vmatmul.bf16.gmra.mxu0 %v1396
        %v1858 = vpop.f32.mrf.mxu0
        %v1859 = vadd.f32 %v1433, %v1858
        %v1860 = vpop.f32.mrf.mxu0
        %v1861 = vadd.f32 %v1433, %v1860
        %1862 = vdwg.mxu0
        %1863 = vmatpush.bf16.msra.mxu0 %v1563
        %1864 = vmatpush.bf16.msra.mxu0 %v1561
        %1865 = vmatpush.bf16.msra.mxu0 %v1559
        %1866 = vmatpush.bf16.msra.mxu0 %v1557
        %1867 = vmatpush.bf16.msra.mxu0 %v1555
        %1868 = vmatpush.bf16.msra.mxu0 %v1553
        %1869 = vmatpush.bf16.msra.mxu0 %v1551
        %1870 = vmatpush.bf16.msra.mxu0 %v1549
        %1871 = vmatmul.bf16.gmra.mxu0 %v1367
        %v1872 = vpop.f32.mrf.mxu0
        %v1873 = vadd.f32 %v1784, %v1872
        %v1874 = vpop.f32.mrf.mxu0
        %v1875 = vadd.f32 %v1786, %v1874
        %1876 = vmatmul.bf16.gmra.mxu0 %v1369
        %v1877 = vpop.f32.mrf.mxu0
        %v1878 = vadd.f32 %v1789, %v1877
        %v1879 = vpop.f32.mrf.mxu0
        %v1880 = vadd.f32 %v1791, %v1879
        %1881 = vmatmul.bf16.gmra.mxu0 %v1371
        %v1882 = vpop.f32.mrf.mxu0
        %v1883 = vadd.f32 %v1794, %v1882
        %v1884 = vpop.f32.mrf.mxu0
        %v1885 = vadd.f32 %v1796, %v1884
        %1886 = vmatmul.bf16.gmra.mxu0 %v1373
        %v1887 = vpop.f32.mrf.mxu0
        %v1888 = vadd.f32 %v1799, %v1887
        %v1889 = vpop.f32.mrf.mxu0
        %v1890 = vadd.f32 %v1801, %v1889
        %1891 = vmatmul.bf16.gmra.mxu0 %v1375
        %v1892 = vpop.f32.mrf.mxu0
        %v1893 = vadd.f32 %v1804, %v1892
        %v1894 = vpop.f32.mrf.mxu0
        %v1895 = vadd.f32 %v1806, %v1894
        %1896 = vmatmul.bf16.gmra.mxu0 %v1377
        %v1897 = vpop.f32.mrf.mxu0
        %v1898 = vadd.f32 %v1809, %v1897
        %v1899 = vpop.f32.mrf.mxu0
        %v1900 = vadd.f32 %v1811, %v1899
        %1901 = vmatmul.bf16.gmra.mxu0 %v1379
        %v1902 = vpop.f32.mrf.mxu0
        %v1903 = vadd.f32 %v1814, %v1902
        %v1904 = vpop.f32.mrf.mxu0
        %v1905 = vadd.f32 %v1816, %v1904
        %1906 = vmatmul.bf16.gmra.mxu0 %v1381
        %v1907 = vpop.f32.mrf.mxu0
        %v1908 = vadd.f32 %v1819, %v1907
        %v1909 = vpop.f32.mrf.mxu0
        %v1910 = vadd.f32 %v1821, %v1909
        %1911 = vmatmul.bf16.gmra.mxu0 %v1383
        %v1912 = vpop.f32.mrf.mxu0
        %v1913 = vadd.f32 %v1824, %v1912
        %v1914 = vpop.f32.mrf.mxu0
        %v1915 = vadd.f32 %v1826, %v1914
        %1916 = vmatmul.bf16.gmra.mxu0 %v1385
        %v1917 = vpop.f32.mrf.mxu0
        %v1918 = vadd.f32 %v1829, %v1917
        %v1919 = vpop.f32.mrf.mxu0
        %v1920 = vadd.f32 %v1831, %v1919
        %1921 = vmatmul.bf16.gmra.mxu0 %v1387
        %v1922 = vpop.f32.mrf.mxu0
        %v1923 = vadd.f32 %v1834, %v1922
        %v1924 = vpop.f32.mrf.mxu0
        %v1925 = vadd.f32 %v1836, %v1924
        %1926 = vmatmul.bf16.gmra.mxu0 %v1389
        %v1927 = vpop.f32.mrf.mxu0
        %v1928 = vadd.f32 %v1839, %v1927
        %v1929 = vpop.f32.mrf.mxu0
        %v1930 = vadd.f32 %v1841, %v1929
        %1931 = vmatmul.bf16.gmra.mxu0 %v1391
        %v1932 = vpop.f32.mrf.mxu0
        %v1933 = vadd.f32 %v1844, %v1932
        %v1934 = vpop.f32.mrf.mxu0
        %v1935 = vadd.f32 %v1846, %v1934
        %1936 = vmatmul.bf16.gmra.mxu0 %v1393
        %v1937 = vpop.f32.mrf.mxu0
        %v1938 = vadd.f32 %v1849, %v1937
        %v1939 = vpop.f32.mrf.mxu0
        %v1940 = vadd.f32 %v1851, %v1939
        %1941 = vmatmul.bf16.gmra.mxu0 %v1395
        %v1942 = vpop.f32.mrf.mxu0
        %v1943 = vadd.f32 %v1854, %v1942
        %v1944 = vpop.f32.mrf.mxu0
        %v1945 = vadd.f32 %v1856, %v1944
        %1946 = vmatmul.bf16.gmra.mxu0 %v1397
        %v1947 = vpop.f32.mrf.mxu0
        %v1948 = vadd.f32 %v1859, %v1947
        %v1949 = vpop.f32.mrf.mxu0
        %v1950 = vadd.f32 %v1861, %v1949
        %1951 = vdwg.mxu0
        %1952 = vst [vmem:[%s349] sm:$0xff] %v1695
        %1953 = vst [vmem:[%s349 + $0x8] sm:$0xff] %v1873
        %1954 = vst [vmem:[%s349 + $0x10] sm:$0xff] %v1697
        %1955 = vst [vmem:[%s349 + $0x18] sm:$0xff] %v1875
        %1956 = vst [vmem:[%s349 + $0x20] sm:$0xff] %v1700
        %1957 = vst [vmem:[%s349 + $0x28] sm:$0xff] %v1878
        %1958 = vst [vmem:[%s349 + $0x30] sm:$0xff] %v1702
        %1959 = vst [vmem:[%s349 + $0x38] sm:$0xff] %v1880
        %1960 = vst [vmem:[%s349 + $0x40] sm:$0xff] %v1705
        %1961 = vst [vmem:[%s349 + $0x48] sm:$0xff] %v1883
        %1962 = vst [vmem:[%s349 + $0x50] sm:$0xff] %v1707
        %1963 = vst [vmem:[%s349 + $0x58] sm:$0xff] %v1885
        %1964 = vst [vmem:[%s349 + $0x60] sm:$0xff] %v1710
        %1965 = vst [vmem:[%s349 + $0x68] sm:$0xff] %v1888
        %1966 = vst [vmem:[%s349 + $0x70] sm:$0xff] %v1712
        %1967 = vst [vmem:[%s349 + $0x78] sm:$0xff] %v1890
        %1968 = vst [vmem:[%s349 + $0x80] sm:$0xff] %v1715
        %1969 = vst [vmem:[%s349 + $0x88] sm:$0xff] %v1893
        %1970 = vst [vmem:[%s349 + $0x90] sm:$0xff] %v1717
        %1971 = vst [vmem:[%s349 + $0x98] sm:$0xff] %v1895
        %1972 = vst [vmem:[%s349 + $0xa0] sm:$0xff] %v1720
        %1973 = vst [vmem:[%s349 + $0xa8] sm:$0xff] %v1898
        %1974 = vst [vmem:[%s349 + $0xb0] sm:$0xff] %v1722
        %1975 = vst [vmem:[%s349 + $0xb8] sm:$0xff] %v1900
        %1976 = vst [vmem:[%s349 + $0xc0] sm:$0xff] %v1725
        %1977 = vst [vmem:[%s349 + $0xc8] sm:$0xff] %v1903
        %1978 = vst [vmem:[%s349 + $0xd0] sm:$0xff] %v1727
        %1979 = vst [vmem:[%s349 + $0xd8] sm:$0xff] %v1905
        %1980 = vst [vmem:[%s349 + $0xe0] sm:$0xff] %v1730
        %1981 = vst [vmem:[%s349 + $0xe8] sm:$0xff] %v1908
        %1982 = vst [vmem:[%s349 + $0xf0] sm:$0xff] %v1732
        %1983 = vst [vmem:[%s349 + $0xf8] sm:$0xff] %v1910
        %1984 = vst [vmem:[%s349 + $0x100] sm:$0xff] %v1735
        %1985 = vst [vmem:[%s349 + $0x108] sm:$0xff] %v1913
        %1986 = vst [vmem:[%s349 + $0x110] sm:$0xff] %v1737
        %1987 = vst [vmem:[%s349 + $0x118] sm:$0xff] %v1915
        %1988 = vst [vmem:[%s349 + $0x120] sm:$0xff] %v1740
        %1989 = vst [vmem:[%s349 + $0x128] sm:$0xff] %v1918
        %1990 = vst [vmem:[%s349 + $0x130] sm:$0xff] %v1742
        %1991 = vst [vmem:[%s349 + $0x138] sm:$0xff] %v1920
        %1992 = vst [vmem:[%s349 + $0x140] sm:$0xff] %v1745
        %1993 = vst [vmem:[%s349 + $0x148] sm:$0xff] %v1923
        %1994 = vst [vmem:[%s349 + $0x150] sm:$0xff] %v1747
        %1995 = vst [vmem:[%s349 + $0x158] sm:$0xff] %v1925
        %1996 = vst [vmem:[%s349 + $0x160] sm:$0xff] %v1750
        %1997 = vst [vmem:[%s349 + $0x168] sm:$0xff] %v1928
        %1998 = vst [vmem:[%s349 + $0x170] sm:$0xff] %v1752
        %1999 = vst [vmem:[%s349 + $0x178] sm:$0xff] %v1930
        %2000 = vst [vmem:[%s349 + $0x180] sm:$0xff] %v1755
        %2001 = vst [vmem:[%s349 + $0x188] sm:$0xff] %v1933
        %2002 = vst [vmem:[%s349 + $0x190] sm:$0xff] %v1757
        %2003 = vst [vmem:[%s349 + $0x198] sm:$0xff] %v1935
        %2004 = vst [vmem:[%s349 + $0x1a0] sm:$0xff] %v1760
        %2005 = vst [vmem:[%s349 + $0x1a8] sm:$0xff] %v1938
        %2006 = vst [vmem:[%s349 + $0x1b0] sm:$0xff] %v1762
        %2007 = vst [vmem:[%s349 + $0x1b8] sm:$0xff] %v1940
        %2008 = vst [vmem:[%s349 + $0x1c0] sm:$0xff] %v1765
        %2009 = vst [vmem:[%s349 + $0x1c8] sm:$0xff] %v1943
        %2010 = vst [vmem:[%s349 + $0x1d0] sm:$0xff] %v1767
        %2011 = vst [vmem:[%s349 + $0x1d8] sm:$0xff] %v1945
        %2012 = vst [vmem:[%s349 + $0x1e0] sm:$0xff] %v1770
        %2013 = vst [vmem:[%s349 + $0x1e8] sm:$0xff] %v1948
        %2014 = vst [vmem:[%s349 + $0x1f0] sm:$0xff] %v1772
        %2015 = vst [vmem:[%s349 + $0x1f8] sm:$0xff] %v1950
        %s2016 = sand.u32 %s166, 1
        %s2017 = scalar_lea.sflag [#allocation4], %s2016
        %s2018 = sand.u32 %s166, 1
        %s2019 = smul.addr %s2018, 512
        %s2020 = scalar_lea.vmem [#allocation11], %s2019
        // Predicated region
        $region61: #{tpu_custom_call.1} parent=39 // pred_check
          %p2021 = pneg %p176
        $region62: #{tpu_custom_call.1} parent=39 // pred_check_branch
          %2023 = sbr.rel (%p2021) target = $region64
        $region63: #{tpu_custom_call.1} parent=39 // pred_region
          %s2024 = smul.u32 32, %s28
          %s2025 = smul.u32 2, %s29
          %2027 = vsyncadd %s2017, 0
          %s2028 = smul.addr %s2024, 4
          %s2029 = sadd.s32 %s2025, %s2028
          %s2030 = smul.addr %s2029, 8
          %s2031 = scalar_lea.hbm %s5, %s2030
          %s2032 = sshll.u32 %s2020, 4
          %s2033 = int_to_ptr.vmem [resolvable:$true] %s2032
          %s2034 = sshll.u32 %s2031, 4
          %s2035 = int_to_ptr.hbm [resolvable:$true] %s2034
          %2040 = dma.vmem_to_hbm [thread:$0]  %s2033, 8192, %s2035, %s2017, 256, 512, 16
        $region64: #{tpu_custom_call.1} parent=39 // pred_fallthru
          _
      $region40: #{tpu_custom_call.1} parent=5 // pred_fallthru
        _
      %p2041 = scmp.le.s32.totalorder 2, %s19
      // Predicated region
      $region65: #{tpu_custom_call.1} parent=5 // pred_check
        %p2042 = pneg %p2041
      $region66: #{tpu_custom_call.1} parent=5 // pred_check_branch
        %2044 = sbr.rel (%p2042) target = $region68
      $region67: #{tpu_custom_call.1} parent=5 // pred_region
        %s2045 = ssub.s32 %s19, 2
        // Predicated region
        $region69: #{tpu_custom_call.1} parent=67 // pred_check
          %p2046 = pneg %p182
        $region70: #{tpu_custom_call.1} parent=67 // pred_check_branch
          %2048 = sbr.rel (%p2046) target = $region72
        $region71: #{tpu_custom_call.1} parent=67 // pred_region
          %s2049 = sand.u32 %s167, 1
          %s2050 = scalar_lea.sflag [#allocation4], %s2049
          %s2051 = sand.u32 %s167, 1
          %s2052 = smul.addr %s2051, 512
          %s2053 = scalar_lea.vmem [#allocation11], %s2052
          %2055 = dma.done %s2050, 8192
        $region72: #{tpu_custom_call.1} parent=67 // pred_fallthru
          _
      $region68: #{tpu_custom_call.1} parent=5 // pred_fallthru
        _
    $region6: #{tpu_custom_call.1} parent=1 // loop_footer
      %s23 = sadd.s32 1, %s19
    $region7: #{tpu_custom_call.1} parent=1 // loop_footer_branch
      %18 = sbr.rel target = $region3
    $region8: #{tpu_custom_call.1} parent=1 // loop_exit
      _
    %2056 = vsyncpa [#allocation3], 1
    %s2057 = scalar_lea.sflag [#allocation3], 1
    %2058 = vsyncpa %s2057, 1
    %2059 = vsyncpa [#allocation6], 1
    %2060 = vsyncpa [#allocation9], 1
    %s2061 = scalar_lea.sflag [#allocation9], 1
    %2062 = vsyncpa %s2061, 1
    %2063 = vsyncpa [#allocation4], 1
    %s2064 = scalar_lea.sflag [#allocation4], 1
    %2065 = vsyncpa %s2064, 1

</llo_original>
